<compile_context>
chip_gen: v5e
topology: v5e:2x2
jax: 0.10.0
libtpu: 0.0.40
codegen_flags: <defaults>
</compile_context>

<pallas_src>
import functools

import jax
import jax.numpy as jnp
from jax.experimental import pallas as pl
from jax.experimental.pallas import tpu as pltpu


LANE = 128          # lane width; pad hidden dim / vocab to multiples of this
TILE_N_MAX = 2048   # max lanes per fc (vocab) tile; fits VMEM on v7x (64 MiB)


def _round_up(x, m):
    return (x + m - 1) // m * m


def _pad_to(x, rows, cols):
    r, c = x.shape
    if r == rows and c == cols:
        return x
    return jnp.pad(x, ((0, rows - r), (0, cols - c)))


# ---------------------------------------------------------------------------
# Kernel
# ---------------------------------------------------------------------------
def _decoder_kernel(flag_ref, xe_ref, ctx_ref, h1_ref, c1_ref, h2_ref, c2_ref,
                    w1_ref, b1_ref, w2_ref, b2_ref, wfc_ref, bfc_ref,
                    logits_ref, h1o_ref, c1o_ref, h2o_ref, c2o_ref,
                    h2n_ref, *, dp):
    f32 = jnp.float32
    bf16 = jnp.bfloat16

    # ---- LSTM part: only on the first vocab tile -------------------------
    @pl.when(pl.program_id(0) == 0)
    def _lstm():
        first = flag_ref[0] != 0        # PyTorch first_step: ignore given state
        h1 = jnp.where(first, 0.0, h1_ref[...])
        c1 = jnp.where(first, 0.0, c1_ref[...])
        h2 = jnp.where(first, 0.0, h2_ref[...])
        c2 = jnp.where(first, 0.0, c2_ref[...])

        # LSTMCell 1: single fused MXU op over [xe | ctx | h1]  (K = 3*Dp)
        x1 = jnp.concatenate([xe_ref[...], ctx_ref[...], h1.astype(bf16)],
                             axis=1)
        g1 = jnp.dot(x1, w1_ref[...], preferred_element_type=f32) + b1_ref[...]
        i1 = jax.nn.sigmoid(g1[:, 0 * dp:1 * dp])
        f1 = jax.nn.sigmoid(g1[:, 1 * dp:2 * dp])
        gg1 = jnp.tanh(g1[:, 2 * dp:3 * dp])
        o1 = jax.nn.sigmoid(g1[:, 3 * dp:4 * dp])
        c1n = f1 * c1 + i1 * gg1
        h1n = o1 * jnp.tanh(c1n)

        # LSTMCell 2: single fused MXU op over [h1n | h2]  (K = 2*Dp)
        x2 = jnp.concatenate([h1n.astype(bf16), h2.astype(bf16)], axis=1)
        g2 = jnp.dot(x2, w2_ref[...], preferred_element_type=f32) + b2_ref[...]
        i2 = jax.nn.sigmoid(g2[:, 0 * dp:1 * dp])
        f2 = jax.nn.sigmoid(g2[:, 1 * dp:2 * dp])
        gg2 = jnp.tanh(g2[:, 2 * dp:3 * dp])
        o2 = jax.nn.sigmoid(g2[:, 3 * dp:4 * dp])
        c2n = f2 * c2 + i2 * gg2
        h2n = o2 * jnp.tanh(c2n)

        h1o_ref[...] = h1n
        c1o_ref[...] = c1n
        h2o_ref[...] = h2n
        c2o_ref[...] = c2n
        # Dropout(p=0.05) is eval-mode identity.
        # TODO(synk): training-mode dropout with pltpu PRNG not implemented.
        h2n_ref[...] = h2n.astype(bf16)     # carried across vocab tiles

    # ---- tied Linear: one lane-dense (Bp, TILE_N) tile per grid step ------
    logits_ref[...] = (
        jnp.dot(h2n_ref[...], wfc_ref[...], preferred_element_type=f32)
        + bfc_ref[...]
    )


# ---------------------------------------------------------------------------
# One-time parameter preparation (all transposes / fusion / padding / bf16)
# ---------------------------------------------------------------------------
def init_decoder_params(key, out_dim, lstm_dim):
    """Deterministic parameter init mirroring the PyTorch module's shapes."""
    ks = jax.random.split(key, 10)
    D = lstm_dim
    bound = 1.0 / jnp.sqrt(D)

    # Tied weight: embed.weight = fc.weight, shape [out_dim, lstm_dim]
    embed_w = jax.random.normal(ks[0], (out_dim, D), jnp.float32)

    w_ih1 = jax.random.uniform(ks[1], (4 * D, 2 * D), jnp.float32, -bound, bound)
    w_hh1 = jax.random.uniform(ks[2], (4 * D, D), jnp.float32, -bound, bound)
    b_ih1 = jax.random.uniform(ks[3], (4 * D,), jnp.float32, -bound, bound)
    b_hh1 = jax.random.uniform(ks[4], (4 * D,), jnp.float32, -bound, bound)

    w_ih2 = jax.random.uniform(ks[5], (4 * D, D), jnp.float32, -bound, bound)
    w_hh2 = jax.random.uniform(ks[6], (4 * D, D), jnp.float32, -bound, bound)
    b_ih2 = jax.random.uniform(ks[7], (4 * D,), jnp.float32, -bound, bound)
    b_hh2 = jax.random.uniform(ks[8], (4 * D,), jnp.float32, -bound, bound)

    fc_b = jax.random.uniform(ks[9], (out_dim,), jnp.float32, -bound, bound)

    return dict(embed_w=embed_w,
                w_ih1=w_ih1, w_hh1=w_hh1, b_ih1=b_ih1, b_hh1=b_hh1,
                w_ih2=w_ih2, w_hh2=w_hh2, b_ih2=b_ih2, b_hh2=b_hh2,
                fc_b=fc_b)


def prepare_decoder_params(params):
    """Fuse / transpose / pad / cast once; reuse across all decode steps."""
    embed_w = params["embed_w"].astype(jnp.float32)
    out_dim, D = embed_w.shape
    Dp = _round_up(D, LANE)

    Np = _round_up(out_dim, LANE)
    if Np <= TILE_N_MAX:
        tile_n = Np
    else:
        tile_n = TILE_N_MAX
        Np = _round_up(out_dim, tile_n)

    def gate_pad_cols(w_t):  # [in, 4*D] (gate-major cols) -> [in, 4*Dp]
        i = w_t.shape[0]
        return jnp.pad(w_t.reshape(i, 4, D),
                       ((0, 0), (0, 0), (0, Dp - D))).reshape(i, 4 * Dp)

    def pad_rows(w, rows):
        return jnp.pad(w, ((0, rows - w.shape[0]), (0, 0)))

    # Cell 1: rows [xe | ctx | h1] -> gates, PyTorch gate order (i, f, g, o).
    wih1_t = gate_pad_cols(params["w_ih1"].T)            # [2D, 4*Dp]
    whh1_t = gate_pad_cols(params["w_hh1"].T)            # [D,  4*Dp]
    w1 = jnp.concatenate([pad_rows(wih1_t[:D], Dp),
                          pad_rows(wih1_t[D:], Dp),
                          pad_rows(whh1_t, Dp)], axis=0).astype(jnp.bfloat16)
    b1 = jnp.pad((params["b_ih1"] + params["b_hh1"]).reshape(4, D),
                 ((0, 0), (0, Dp - D))).reshape(1, 4 * Dp).astype(jnp.float32)

    # Cell 2: rows [h1n | h2] -> gates.
    wih2_t = gate_pad_cols(params["w_ih2"].T)            # [D, 4*Dp]
    whh2_t = gate_pad_cols(params["w_hh2"].T)            # [D, 4*Dp]
    w2 = jnp.concatenate([pad_rows(wih2_t, Dp),
                          pad_rows(whh2_t, Dp)], axis=0).astype(jnp.bfloat16)
    b2 = jnp.pad((params["b_ih2"] + params["b_hh2"]).reshape(4, D),
                 ((0, 0), (0, Dp - D))).reshape(1, 4 * Dp).astype(jnp.float32)

    # Tied fc weight (right-multiply layout) + bias, vocab padded to Np.
    wfc = jnp.pad(embed_w.T, ((0, Dp - D), (0, Np - out_dim))).astype(jnp.bfloat16)
    bfc = jnp.pad(params["fc_b"], (0, Np - out_dim)).reshape(1, Np).astype(jnp.float32)

    # Padded bf16 embedding table for the (wrapper-side) gather.
    embed = jnp.pad(embed_w, ((0, 0), (0, Dp - D))).astype(jnp.bfloat16)

    return dict(w1=w1, b1=b1, w2=w2, b2=b2, wfc=wfc, bfc=bfc, embed=embed,
                dims=(out_dim, D, Dp, Np, tile_n))


def init_decoder_state(prep, batch):
    """Zero recurrent state in the padded [Bp, Dp] layout the kernel uses."""
    _, _, Dp, _, _ = prep["dims"]
    Bp = _round_up(max(batch, 8), 8)
    z = jnp.zeros((Bp, Dp), jnp.float32)
    return z, z, z, z


# ---------------------------------------------------------------------------
# Forward (one decode step)
# ---------------------------------------------------------------------------
def decoder_forward(prep, x_ids, context, hidden1, cell1, hidden2, cell2,
                    first_step):
    """Equivalent of Decoder.forward.

    States may be passed padded ([Bp, Dp], as returned by a previous step /
    init_decoder_state) or unpadded ([B, D]); they are returned padded so they
    can be fed straight back (and are HBM-aliased with the inputs).
    `first_step` may be a Python bool or a scalar array (runtime flag).
    """
    out_dim, D, Dp, Np, tile_n = prep["dims"]
    B = x_ids.shape[0]
    Bp = _round_up(max(B, 8), 8)
    f32, bf16 = jnp.float32, jnp.bfloat16

    # Per-step glue (tiny): embedding gather, batch/lane padding, flag.
    xe = _pad_to(jnp.take(prep["embed"], x_ids, axis=0), Bp, Dp)       # bf16
    ctx = _pad_to(context.astype(f32), Bp, Dp).astype(bf16)
    h1 = _pad_to(hidden1.astype(f32), Bp, Dp)
    c1 = _pad_to(cell1.astype(f32), Bp, Dp)
    h2 = _pad_to(hidden2.astype(f32), Bp, Dp)
    c2 = _pad_to(cell2.astype(f32), Bp, Dp)
    flag = jnp.asarray(first_step, jnp.int32).reshape(1)

    n_tiles = Np // tile_n
    state_spec = pl.BlockSpec((Bp, Dp), lambda j: (0, 0))

    in_specs = [
        pl.BlockSpec(memory_space=pltpu.MemorySpace.SMEM),    # first_step flag
        state_spec,                                           # xe
        state_spec,                                           # ctx
        state_spec, state_spec, state_spec, state_spec,       # h1 c1 h2 c2
        pl.BlockSpec((3 * Dp, 4 * Dp), lambda j: (0, 0)),     # W1 (fused)
        pl.BlockSpec((1, 4 * Dp), lambda j: (0, 0)),          # b1
        pl.BlockSpec((2 * Dp, 4 * Dp), lambda j: (0, 0)),     # W2 (fused)
        pl.BlockSpec((1, 4 * Dp), lambda j: (0, 0)),          # b2
        pl.BlockSpec((Dp, tile_n), lambda j: (0, j)),         # wfc (pipelined)
        pl.BlockSpec((1, tile_n), lambda j: (0, j)),          # bfc
    ]
    out_specs = (
        pl.BlockSpec((Bp, tile_n), lambda j: (0, j)),         # logits
        state_spec, state_spec, state_spec, state_spec,       # new h1 c1 h2 c2
    )
    out_shapes = (
        jax.ShapeDtypeStruct((Bp, Np), f32),
        jax.ShapeDtypeStruct((Bp, Dp), f32),
        jax.ShapeDtypeStruct((Bp, Dp), f32),
        jax.ShapeDtypeStruct((Bp, Dp), f32),
        jax.ShapeDtypeStruct((Bp, Dp), f32),
    )

    kernel = functools.partial(_decoder_kernel, dp=Dp)
    outs = pl.pallas_call(
        kernel,
        out_shape=out_shapes,
        grid_spec=pltpu.PrefetchScalarGridSpec(
            num_scalar_prefetch=0,
            grid=(n_tiles,),
            in_specs=in_specs,
            out_specs=out_specs,
            scratch_shapes=[pltpu.VMEM((Bp, Dp), bf16)],      # h2n carry
        ),
        # state outputs reuse the state input HBM buffers
        input_output_aliases={3: 1, 4: 2, 5: 3, 6: 4},
        compiler_params=pltpu.CompilerParams(
            dimension_semantics=("arbitrary",),
        ),
    )(flag, xe, ctx, h1, c1, h2, c2,
      prep["w1"], prep["b1"], prep["w2"], prep["b2"], prep["wfc"], prep["bfc"])

    logits, h1n, c1n, h2n, c2n = outs
    if Bp != B or Np != out_dim:
        logits = logits[:B, :out_dim]
    return logits, h1n, c1n, h2n, c2n


# ---------------------------------------------------------------------------
# Pure-JAX reference (PyTorch semantics) for verification
# ---------------------------------------------------------------------------
def _reference(params, x_ids, context, h1, c1, h2, c2, first_step):
    xe = params["embed_w"][x_ids]
    x = jnp.concatenate([xe, context], axis=1)
    if first_step:
        h1 = jnp.zeros_like(h1); c1 = jnp.zeros_like(c1)
        h2 = jnp.zeros_like(h2); c2 = jnp.zeros_like(c2)

    def cell(xin, h, c, w_ih, w_hh, b_ih, b_hh):
        g = xin @ w_ih.T + h @ w_hh.T + b_ih + b_hh
        i, f, gg, o = jnp.split(g, 4, axis=1)
        i, f, o = jax.nn.sigmoid(i), jax.nn.sigmoid(f), jax.nn.sigmoid(o)
        gg = jnp.tanh(gg)
        c = f * c + i * gg
        return o * jnp.tanh(c), c

    h1n, c1n = cell(x, h1, c1, params["w_ih1"], params["w_hh1"],
                    params["b_ih1"], params["b_hh1"])
    h2n, c2n = cell(h1n, h2, c2, params["w_ih2"], params["w_hh2"],
                    params["b_ih2"], params["b_hh2"])
    logits = h2n @ params["embed_w"].T + params["fc_b"]
    return logits, h1n, c1n, h2n, c2n


if __name__ == "__main__":
    B = 4
    LSTM_DIM = 32
    OUT_DIM = 16

    key = jax.random.PRNGKey(0)
    k_params, k_ids, k_ctx = jax.random.split(key, 3)

    params = init_decoder_params(k_params, OUT_DIM, LSTM_DIM)
    prep = prepare_decoder_params(params)

    x_ids = jax.random.randint(k_ids, (B,), 0, OUT_DIM, dtype=jnp.int32)
    context = jax.random.normal(k_ctx, (B, LSTM_DIM), jnp.float32)

    # step 1: first_step=True (states ignored / zeroed inside the kernel)
    state0 = init_decoder_state(prep, B)
    out1 = decoder_forward(prep, x_ids, context, *state0, first_step=True)
    jax.block_until_ready(out1)

    # step 2: first_step=False, feeding back the padded states (aliased)
    out2 = decoder_forward(prep, x_ids, context,
                           out1[1], out1[2], out1[3], out1[4],
                           first_step=False)
    jax.block_until_ready(out2)

    # Verify against the f32 pure-JAX reference (bf16-matmul tolerance).
    zB = jnp.zeros((B, LSTM_DIM), jnp.float32)
    ref1 = _reference(params, x_ids, context, zB, zB, zB, zB, True)
    ref2 = _reference(params, x_ids, context,
                      ref1[1], ref1[2], ref1[3], ref1[4], False)

    def close(a, b):
        return bool(jnp.allclose(a, b, rtol=5e-2, atol=5e-2))

    assert out1[0].shape == (B, OUT_DIM) and out2[0].shape == (B, OUT_DIM)
    assert close(out1[0], ref1[0]) and close(out2[0], ref2[0])
    for got, ref in zip(out1[1:], ref1[1:]):
        assert close(got[:B, :LSTM_DIM], ref)
    for got, ref in zip(out2[1:], ref2[1:]):
        assert close(got[:B, :LSTM_DIM], ref)

    print("KERNEL_OK")
</pallas_src>

<mosaic_0001>
module attributes {stable_mosaic.version = 11 : i64} {
  func.func @_decoder_kernel(%arg0: i32, %arg1: memref<1xi32, #tpu.memory_space<smem>>, %arg2: memref<8x128xbf16, #tpu.memory_space<vmem>>, %arg3: memref<8x128xbf16, #tpu.memory_space<vmem>>, %arg4: memref<8x128xf32, #tpu.memory_space<vmem>>, %arg5: memref<8x128xf32, #tpu.memory_space<vmem>>, %arg6: memref<8x128xf32, #tpu.memory_space<vmem>>, %arg7: memref<8x128xf32, #tpu.memory_space<vmem>>, %arg8: memref<384x512xbf16, #tpu.memory_space<vmem>>, %arg9: memref<1x512xf32, #tpu.memory_space<vmem>>, %arg10: memref<256x512xbf16, #tpu.memory_space<vmem>>, %arg11: memref<1x512xf32, #tpu.memory_space<vmem>>, %arg12: memref<128x128xbf16, #tpu.memory_space<vmem>>, %arg13: memref<1x128xf32, #tpu.memory_space<vmem>>, %arg14: memref<8x128xf32, #tpu.memory_space<vmem>>, %arg15: memref<8x128xf32, #tpu.memory_space<vmem>>, %arg16: memref<8x128xf32, #tpu.memory_space<vmem>>, %arg17: memref<8x128xf32, #tpu.memory_space<vmem>>, %arg18: memref<8x128xf32, #tpu.memory_space<vmem>>, %arg19: memref<8x128xbf16, #tpu.memory_space<vmem>>) attributes {dimension_semantics = [#tpu.dimension_semantics<arbitrary>], iteration_bounds = array<i64: 1>, scalar_prefetch = 0 : i64, scratch_operands = 1 : i64, tpu.core_type = #tpu.core_type<tc>, window_params = [{transform_indices = @transform_0, window_bounds = array<i64: 1>}, {pipeline_mode = #tpu.pipeline_mode<synchronous>, transform_indices = @transform_1, window_bounds = array<i64: 8, 128>}, {pipeline_mode = #tpu.pipeline_mode<synchronous>, transform_indices = @transform_2, window_bounds = array<i64: 8, 128>}, {pipeline_mode = #tpu.pipeline_mode<synchronous>, transform_indices = @transform_3, window_bounds = array<i64: 8, 128>}, {pipeline_mode = #tpu.pipeline_mode<synchronous>, transform_indices = @transform_4, window_bounds = array<i64: 8, 128>}, {pipeline_mode = #tpu.pipeline_mode<synchronous>, transform_indices = @transform_5, window_bounds = array<i64: 8, 128>}, {pipeline_mode = #tpu.pipeline_mode<synchronous>, transform_indices = @transform_6, window_bounds = array<i64: 8, 128>}, {pipeline_mode = #tpu.pipeline_mode<synchronous>, transform_indices = @transform_7, window_bounds = array<i64: 384, 512>}, {pipeline_mode = #tpu.pipeline_mode<synchronous>, transform_indices = @transform_8, window_bounds = array<i64: 1, 512>}, {pipeline_mode = #tpu.pipeline_mode<synchronous>, transform_indices = @transform_9, window_bounds = array<i64: 256, 512>}, {pipeline_mode = #tpu.pipeline_mode<synchronous>, transform_indices = @transform_10, window_bounds = array<i64: 1, 512>}, {transform_indices = @transform_11, window_bounds = array<i64: 128, 128>}, {transform_indices = @transform_12, window_bounds = array<i64: 1, 128>}, {transform_indices = @transform_13, window_bounds = array<i64: 8, 128>}, {pipeline_mode = #tpu.pipeline_mode<synchronous>, transform_indices = @transform_14, window_bounds = array<i64: 8, 128>}, {pipeline_mode = #tpu.pipeline_mode<synchronous>, transform_indices = @transform_15, window_bounds = array<i64: 8, 128>}, {pipeline_mode = #tpu.pipeline_mode<synchronous>, transform_indices = @transform_16, window_bounds = array<i64: 8, 128>}, {pipeline_mode = #tpu.pipeline_mode<synchronous>, transform_indices = @transform_17, window_bounds = array<i64: 8, 128>}]} {
    %c0_i32 = arith.constant 0 : i32
    %0 = arith.cmpi eq, %arg0, %c0_i32 : i32
    %1 = arith.extui %0 : i1 to i32
    %c0_i32_0 = arith.constant 0 : i32
    %2 = arith.cmpi ne, %1, %c0_i32_0 : i32
    scf.if %2 {
      %c0_8 = arith.constant 0 : index
      %10 = memref.load %arg1[%c0_8] : memref<1xi32, #tpu.memory_space<smem>>
      %c0_i32_9 = arith.constant 0 : i32
      %11 = arith.cmpi ne, %10, %c0_i32_9 : i32
      %c0_10 = arith.constant 0 : index
      %c0_11 = arith.constant 0 : index
      %12 = vector.load %arg4[%c0_10, %c0_11] : memref<8x128xf32, #tpu.memory_space<vmem>>, vector<8x128xf32>
      %cst_12 = arith.constant 0.000000e+00 : f32
      %13 = vector.broadcast %cst_12 : f32 to vector<8x128xf32>
      %14 = arith.select %11, %13, %12 : vector<8x128xf32>
      %c0_13 = arith.constant 0 : index
      %c0_14 = arith.constant 0 : index
      %15 = vector.load %arg5[%c0_13, %c0_14] : memref<8x128xf32, #tpu.memory_space<vmem>>, vector<8x128xf32>
      %cst_15 = arith.constant 0.000000e+00 : f32
      %16 = vector.broadcast %cst_15 : f32 to vector<8x128xf32>
      %17 = arith.select %11, %16, %15 : vector<8x128xf32>
      %c0_16 = arith.constant 0 : index
      %c0_17 = arith.constant 0 : index
      %18 = vector.load %arg6[%c0_16, %c0_17] : memref<8x128xf32, #tpu.memory_space<vmem>>, vector<8x128xf32>
      %cst_18 = arith.constant 0.000000e+00 : f32
      %19 = vector.broadcast %cst_18 : f32 to vector<8x128xf32>
      %20 = arith.select %11, %19, %18 : vector<8x128xf32>
      %c0_19 = arith.constant 0 : index
      %c0_20 = arith.constant 0 : index
      %21 = vector.load %arg7[%c0_19, %c0_20] : memref<8x128xf32, #tpu.memory_space<vmem>>, vector<8x128xf32>
      %cst_21 = arith.constant 0.000000e+00 : f32
      %22 = vector.broadcast %cst_21 : f32 to vector<8x128xf32>
      %23 = arith.select %11, %22, %21 : vector<8x128xf32>
      %c0_22 = arith.constant 0 : index
      %c0_23 = arith.constant 0 : index
      %24 = vector.load %arg2[%c0_22, %c0_23] : memref<8x128xbf16, #tpu.memory_space<vmem>>, vector<8x128xbf16>
      %c0_24 = arith.constant 0 : index
      %c0_25 = arith.constant 0 : index
      %25 = vector.load %arg3[%c0_24, %c0_25] : memref<8x128xbf16, #tpu.memory_space<vmem>>, vector<8x128xbf16>
      %26 = arith.truncf %14 : vector<8x128xf32> to vector<8x128xbf16>
      %27 = tpu.concatenate %24, %25, %26 in 1 : vector<8x128xbf16>, vector<8x128xbf16>, vector<8x128xbf16> -> vector<8x384xbf16>
      %c0_26 = arith.constant 0 : index
      %c0_27 = arith.constant 0 : index
      %28 = vector.load %arg8[%c0_26, %c0_27] : memref<384x512xbf16, #tpu.memory_space<vmem>>, vector<384x512xbf16>
      %cst_28 = arith.constant dense<0.000000e+00> : vector<8x512xf32>
      %29 = tpu.matmul %27, %28, %cst_28 {dimension_numbers = #tpu.dot_dimension_numbers<[1], [0], [0], [1], [0, 0, 1, 1], [], []>} : vector<8x384xbf16>, vector<384x512xbf16>, vector<8x512xf32> -> vector<8x512xf32>
      %c0_29 = arith.constant 0 : index
      %c0_30 = arith.constant 0 : index
      %30 = vector.load %arg9[%c0_29, %c0_30] : memref<1x512xf32, #tpu.memory_space<vmem>>, vector<1x512xf32>
      %31 = vector.broadcast %30 : vector<1x512xf32> to vector<8x512xf32>
      %32 = arith.addf %29, %31 : vector<8x512xf32>
      %33 = vector.extract_strided_slice %32 {offsets = [0, 0], sizes = [8, 128], strides = [1, 1]} : vector<8x512xf32> to vector<8x128xf32>
      %34 = arith.negf %33 : vector<8x128xf32>
      %35 = math.exp %34 : vector<8x128xf32>
      %cst_31 = arith.constant 1.000000e+00 : f32
      %36 = vector.broadcast %cst_31 : f32 to vector<8x128xf32>
      %37 = arith.addf %36, %35 : vector<8x128xf32>
      %38 = arith.divf %36, %37 : vector<8x128xf32>
      %39 = vector.extract_strided_slice %32 {offsets = [0, 128], sizes = [8, 128], strides = [1, 1]} : vector<8x512xf32> to vector<8x128xf32>
      %40 = arith.negf %39 : vector<8x128xf32>
      %41 = math.exp %40 : vector<8x128xf32>
      %cst_32 = arith.constant 1.000000e+00 : f32
      %42 = vector.broadcast %cst_32 : f32 to vector<8x128xf32>
      %43 = arith.addf %42, %41 : vector<8x128xf32>
      %44 = arith.divf %42, %43 : vector<8x128xf32>
      %45 = vector.extract_strided_slice %32 {offsets = [0, 256], sizes = [8, 128], strides = [1, 1]} : vector<8x512xf32> to vector<8x128xf32>
      %46 = math.tanh %45 : vector<8x128xf32>
      %47 = vector.extract_strided_slice %32 {offsets = [0, 384], sizes = [8, 128], strides = [1, 1]} : vector<8x512xf32> to vector<8x128xf32>
      %48 = arith.negf %47 : vector<8x128xf32>
      %49 = math.exp %48 : vector<8x128xf32>
      %cst_33 = arith.constant 1.000000e+00 : f32
      %50 = vector.broadcast %cst_33 : f32 to vector<8x128xf32>
      %51 = arith.addf %50, %49 : vector<8x128xf32>
      %52 = arith.divf %50, %51 : vector<8x128xf32>
      %53 = arith.mulf %44, %17 : vector<8x128xf32>
      %54 = arith.mulf %38, %46 : vector<8x128xf32>
      %55 = arith.addf %53, %54 : vector<8x128xf32>
      %56 = math.tanh %55 : vector<8x128xf32>
      %57 = arith.mulf %52, %56 : vector<8x128xf32>
      %58 = arith.truncf %57 : vector<8x128xf32> to vector<8x128xbf16>
      %59 = arith.truncf %20 : vector<8x128xf32> to vector<8x128xbf16>
      %60 = tpu.concatenate %58, %59 in 1 : vector<8x128xbf16>, vector<8x128xbf16> -> vector<8x256xbf16>
      %c0_34 = arith.constant 0 : index
      %c0_35 = arith.constant 0 : index
      %61 = vector.load %arg10[%c0_34, %c0_35] : memref<256x512xbf16, #tpu.memory_space<vmem>>, vector<256x512xbf16>
      %cst_36 = arith.constant dense<0.000000e+00> : vector<8x512xf32>
      %62 = tpu.matmul %60, %61, %cst_36 {dimension_numbers = #tpu.dot_dimension_numbers<[1], [0], [0], [1], [0, 0, 1, 1], [], []>} : vector<8x256xbf16>, vector<256x512xbf16>, vector<8x512xf32> -> vector<8x512xf32>
      %c0_37 = arith.constant 0 : index
      %c0_38 = arith.constant 0 : index
      %63 = vector.load %arg11[%c0_37, %c0_38] : memref<1x512xf32, #tpu.memory_space<vmem>>, vector<1x512xf32>
      %64 = vector.broadcast %63 : vector<1x512xf32> to vector<8x512xf32>
      %65 = arith.addf %62, %64 : vector<8x512xf32>
      %66 = vector.extract_strided_slice %65 {offsets = [0, 0], sizes = [8, 128], strides = [1, 1]} : vector<8x512xf32> to vector<8x128xf32>
      %67 = arith.negf %66 : vector<8x128xf32>
      %68 = math.exp %67 : vector<8x128xf32>
      %cst_39 = arith.constant 1.000000e+00 : f32
      %69 = vector.broadcast %cst_39 : f32 to vector<8x128xf32>
      %70 = arith.addf %69, %68 : vector<8x128xf32>
      %71 = arith.divf %69, %70 : vector<8x128xf32>
      %72 = vector.extract_strided_slice %65 {offsets = [0, 128], sizes = [8, 128], strides = [1, 1]} : vector<8x512xf32> to vector<8x128xf32>
      %73 = arith.negf %72 : vector<8x128xf32>
      %74 = math.exp %73 : vector<8x128xf32>
      %cst_40 = arith.constant 1.000000e+00 : f32
      %75 = vector.broadcast %cst_40 : f32 to vector<8x128xf32>
      %76 = arith.addf %75, %74 : vector<8x128xf32>
      %77 = arith.divf %75, %76 : vector<8x128xf32>
      %78 = vector.extract_strided_slice %65 {offsets = [0, 256], sizes = [8, 128], strides = [1, 1]} : vector<8x512xf32> to vector<8x128xf32>
      %79 = math.tanh %78 : vector<8x128xf32>
      %80 = vector.extract_strided_slice %65 {offsets = [0, 384], sizes = [8, 128], strides = [1, 1]} : vector<8x512xf32> to vector<8x128xf32>
      %81 = arith.negf %80 : vector<8x128xf32>
      %82 = math.exp %81 : vector<8x128xf32>
      %cst_41 = arith.constant 1.000000e+00 : f32
      %83 = vector.broadcast %cst_41 : f32 to vector<8x128xf32>
      %84 = arith.addf %83, %82 : vector<8x128xf32>
      %85 = arith.divf %83, %84 : vector<8x128xf32>
      %86 = arith.mulf %77, %23 : vector<8x128xf32>
      %87 = arith.mulf %71, %79 : vector<8x128xf32>
      %88 = arith.addf %86, %87 : vector<8x128xf32>
      %89 = math.tanh %88 : vector<8x128xf32>
      %90 = arith.mulf %85, %89 : vector<8x128xf32>
      %c0_42 = arith.constant 0 : index
      %c0_43 = arith.constant 0 : index
      %91 = vector.load %arg15[%c0_42, %c0_43] : memref<8x128xf32, #tpu.memory_space<vmem>>, vector<8x128xf32>
      tpu.vector_store %arg15[%c0_42, %c0_43], %57 {strides = array<i32>} : memref<8x128xf32, #tpu.memory_space<vmem>>, vector<8x128xf32>,
      %c0_44 = arith.constant 0 : index
      %c0_45 = arith.constant 0 : index
      %92 = vector.load %arg16[%c0_44, %c0_45] : memref<8x128xf32, #tpu.memory_space<vmem>>, vector<8x128xf32>
      tpu.vector_store %arg16[%c0_44, %c0_45], %55 {strides = array<i32>} : memref<8x128xf32, #tpu.memory_space<vmem>>, vector<8x128xf32>,
      %c0_46 = arith.constant 0 : index
      %c0_47 = arith.constant 0 : index
      %93 = vector.load %arg17[%c0_46, %c0_47] : memref<8x128xf32, #tpu.memory_space<vmem>>, vector<8x128xf32>
      tpu.vector_store %arg17[%c0_46, %c0_47], %90 {strides = array<i32>} : memref<8x128xf32, #tpu.memory_space<vmem>>, vector<8x128xf32>,
      %c0_48 = arith.constant 0 : index
      %c0_49 = arith.constant 0 : index
      %94 = vector.load %arg18[%c0_48, %c0_49] : memref<8x128xf32, #tpu.memory_space<vmem>>, vector<8x128xf32>
      tpu.vector_store %arg18[%c0_48, %c0_49], %88 {strides = array<i32>} : memref<8x128xf32, #tpu.memory_space<vmem>>, vector<8x128xf32>,
      %95 = arith.truncf %90 : vector<8x128xf32> to vector<8x128xbf16>
      %c0_50 = arith.constant 0 : index
      %c0_51 = arith.constant 0 : index
      %96 = vector.load %arg19[%c0_50, %c0_51] : memref<8x128xbf16, #tpu.memory_space<vmem>>, vector<8x128xbf16>
      tpu.vector_store %arg19[%c0_50, %c0_51], %95 {strides = array<i32>} : memref<8x128xbf16, #tpu.memory_space<vmem>>, vector<8x128xbf16>,
    } else {
    }
    %c0 = arith.constant 0 : index
    %c0_1 = arith.constant 0 : index
    %3 = vector.load %arg19[%c0, %c0_1] : memref<8x128xbf16, #tpu.memory_space<vmem>>, vector<8x128xbf16>
    %c0_2 = arith.constant 0 : index
    %c0_3 = arith.constant 0 : index
    %4 = vector.load %arg12[%c0_2, %c0_3] : memref<128x128xbf16, #tpu.memory_space<vmem>>, vector<128x128xbf16>
    %cst = arith.constant dense<0.000000e+00> : vector<8x128xf32>
    %5 = tpu.matmul %3, %4, %cst {dimension_numbers = #tpu.dot_dimension_numbers<[1], [0], [0], [1], [0, 0, 1, 1], [], []>} : vector<8x128xbf16>, vector<128x128xbf16>, vector<8x128xf32> -> vector<8x128xf32>
    %c0_4 = arith.constant 0 : index
    %c0_5 = arith.constant 0 : index
    %6 = vector.load %arg13[%c0_4, %c0_5] : memref<1x128xf32, #tpu.memory_space<vmem>>, vector<1x128xf32>
    %7 = vector.broadcast %6 : vector<1x128xf32> to vector<8x128xf32>
    %8 = arith.addf %5, %7 : vector<8x128xf32>
    %c0_6 = arith.constant 0 : index
    %c0_7 = arith.constant 0 : index
    %9 = vector.load %arg14[%c0_6, %c0_7] : memref<8x128xf32, #tpu.memory_space<vmem>>, vector<8x128xf32>
    tpu.vector_store %arg14[%c0_6, %c0_7], %8 {strides = array<i32>} : memref<8x128xf32, #tpu.memory_space<vmem>>, vector<8x128xf32>,
    return
  }
  func.func @transform_0(%arg0: i32) -> i32 {
    %c0_i32 = arith.constant 0 : i32
    %c0_i32_0 = arith.constant 0 : i32
    return %c0_i32 : i32
  }
  func.func @transform_1(%arg0: i32) -> (i32, i32) {
    %c0_i32 = arith.constant 0 : i32
    %c0_i32_0 = arith.constant 0 : i32
    %c0_i32_1 = arith.constant 0 : i32
    return %c0_i32, %c0_i32_0 : i32, i32
  }
  func.func @transform_2(%arg0: i32) -> (i32, i32) {
    %c0_i32 = arith.constant 0 : i32
    %c0_i32_0 = arith.constant 0 : i32
    %c0_i32_1 = arith.constant 0 : i32
    return %c0_i32, %c0_i32_0 : i32, i32
  }
  func.func @transform_3(%arg0: i32) -> (i32, i32) {
    %c0_i32 = arith.constant 0 : i32
    %c0_i32_0 = arith.constant 0 : i32
    %c0_i32_1 = arith.constant 0 : i32
    return %c0_i32, %c0_i32_0 : i32, i32
  }
  func.func @transform_4(%arg0: i32) -> (i32, i32) {
    %c0_i32 = arith.constant 0 : i32
    %c0_i32_0 = arith.constant 0 : i32
    %c0_i32_1 = arith.constant 0 : i32
    return %c0_i32, %c0_i32_0 : i32, i32
  }
  func.func @transform_5(%arg0: i32) -> (i32, i32) {
    %c0_i32 = arith.constant 0 : i32
    %c0_i32_0 = arith.constant 0 : i32
    %c0_i32_1 = arith.constant 0 : i32
    return %c0_i32, %c0_i32_0 : i32, i32
  }
  func.func @transform_6(%arg0: i32) -> (i32, i32) {
    %c0_i32 = arith.constant 0 : i32
    %c0_i32_0 = arith.constant 0 : i32
    %c0_i32_1 = arith.constant 0 : i32
    return %c0_i32, %c0_i32_0 : i32, i32
  }
  func.func @transform_7(%arg0: i32) -> (i32, i32) {
    %c0_i32 = arith.constant 0 : i32
    %c0_i32_0 = arith.constant 0 : i32
    %c0_i32_1 = arith.constant 0 : i32
    return %c0_i32, %c0_i32_0 : i32, i32
  }
  func.func @transform_8(%arg0: i32) -> (i32, i32) {
    %c0_i32 = arith.constant 0 : i32
    %c0_i32_0 = arith.constant 0 : i32
    %c0_i32_1 = arith.constant 0 : i32
    return %c0_i32, %c0_i32_0 : i32, i32
  }
  func.func @transform_9(%arg0: i32) -> (i32, i32) {
    %c0_i32 = arith.constant 0 : i32
    %c0_i32_0 = arith.constant 0 : i32
    %c0_i32_1 = arith.constant 0 : i32
    return %c0_i32, %c0_i32_0 : i32, i32
  }
  func.func @transform_10(%arg0: i32) -> (i32, i32) {
    %c0_i32 = arith.constant 0 : i32
    %c0_i32_0 = arith.constant 0 : i32
    %c0_i32_1 = arith.constant 0 : i32
    return %c0_i32, %c0_i32_0 : i32, i32
  }
  func.func @transform_11(%arg0: i32) -> (i32, i32) {
    %c0_i32 = arith.constant 0 : i32
    %c0_i32_0 = arith.constant 0 : i32
    return %c0_i32, %arg0 : i32, i32
  }
  func.func @transform_12(%arg0: i32) -> (i32, i32) {
    %c0_i32 = arith.constant 0 : i32
    %c0_i32_0 = arith.constant 0 : i32
    return %c0_i32, %arg0 : i32, i32
  }
  func.func @transform_13(%arg0: i32) -> (i32, i32) {
    %c0_i32 = arith.constant 0 : i32
    %c0_i32_0 = arith.constant 0 : i32
    return %c0_i32, %arg0 : i32, i32
  }
  func.func @transform_14(%arg0: i32) -> (i32, i32) {
    %c0_i32 = arith.constant 0 : i32
    %c0_i32_0 = arith.constant 0 : i32
    %c0_i32_1 = arith.constant 0 : i32
    return %c0_i32, %c0_i32_0 : i32, i32
  }
  func.func @transform_15(%arg0: i32) -> (i32, i32) {
    %c0_i32 = arith.constant 0 : i32
    %c0_i32_0 = arith.constant 0 : i32
    %c0_i32_1 = arith.constant 0 : i32
    return %c0_i32, %c0_i32_0 : i32, i32
  }
  func.func @transform_16(%arg0: i32) -> (i32, i32) {
    %c0_i32 = arith.constant 0 : i32
    %c0_i32_0 = arith.constant 0 : i32
    %c0_i32_1 = arith.constant 0 : i32
    return %c0_i32, %c0_i32_0 : i32, i32
  }
  func.func @transform_17(%arg0: i32) -> (i32, i32) {
    %c0_i32 = arith.constant 0 : i32
    %c0_i32_0 = arith.constant 0 : i32
    %c0_i32_1 = arith.constant 0 : i32
    return %c0_i32, %c0_i32_0 : i32, i32
  }
}

</mosaic_0001>

<llo_original>
// kernel: tpu_custom_call.1
$region0: #{tpu_custom_call.1}
  #allocation0 [shape = 'u32[]', space=smem, size = 0x4, offset = 0x4, fixed_abs, tag = 'smem constant byte address 0x4 - core index']
  #allocation1 [shape = 'u32[72,128]{1,0:T(1,128)}', space=vmem, size = 0x9000, scoped, tag = 'internal scratch']
  #allocation2 [shape = 'bf16[8,128]{1,0:T(8,128)(2,1)}', space=vmem, size = 0x800, scoped, tag = 'scratch operand']
  #allocation3 [shape = 's32[1]{0:T(128)S(6)}', space=smem, size = 0x200, scoped, tag = 'scoped memory for tpu_custom_call.1']
  %s0 = inlined_call_operand.<no memory space> [shape: s32[1], index: 0, kind: input, shape index: {}]
  %s1 = inlined_call_operand.vmem [shape: bf16[8,128], index: 1, kind: input, shape index: {}]
  %s2 = inlined_call_operand.vmem [shape: bf16[8,128], index: 2, kind: input, shape index: {}]
  %s3 = inlined_call_operand.hbm [shape: f32[8,128], index: 3, kind: input, shape index: {}, may-alias: {3,14}]
  %s4 = inlined_call_operand.hbm [shape: f32[8,128], index: 4, kind: input, shape index: {}, may-alias: {4,15}]
  %s5 = inlined_call_operand.hbm [shape: f32[8,128], index: 5, kind: input, shape index: {}, may-alias: {5,16}]
  %s6 = inlined_call_operand.hbm [shape: f32[8,128], index: 6, kind: input, shape index: {}, may-alias: {6,17}]
  %s7 = inlined_call_operand.hbm [shape: bf16[384,512], index: 7, kind: input, shape index: {}]
  %s8 = inlined_call_operand.vmem [shape: f32[1,512], index: 8, kind: input, shape index: {}]
  %s9 = inlined_call_operand.hbm [shape: bf16[256,512], index: 9, kind: input, shape index: {}]
  %s10 = inlined_call_operand.vmem [shape: f32[1,512], index: 10, kind: input, shape index: {}]
  %s11 = inlined_call_operand.hbm [shape: bf16[128,128], index: 11, kind: input, shape index: {}]
  %s12 = inlined_call_operand.vmem [shape: f32[1,128], index: 12, kind: input, shape index: {}]
  %s13 = inlined_call_operand.hbm [shape: f32[8,128], index: 13, kind: output, shape index: {0}]
  %s14 = inlined_call_operand.hbm [shape: f32[8,128], index: 14, kind: output, shape index: {1}, may-alias: {3,14}]
  %s15 = inlined_call_operand.hbm [shape: f32[8,128], index: 15, kind: output, shape index: {2}, may-alias: {4,15}]
  %s16 = inlined_call_operand.hbm [shape: f32[8,128], index: 16, kind: output, shape index: {3}, may-alias: {5,16}]
  %s17 = inlined_call_operand.hbm [shape: f32[8,128], index: 17, kind: output, shape index: {4}, may-alias: {6,17}]
  %18 = xla_tuple %s13, %s14, %s15, %s16, %s17
  %s19 = sld [smem:[#allocation0]]
  $region126: #{tpu_custom_call.1} parent=0
    _
  %s21 = ssub.s32 1, %s19
  %s22 = scalar_select 0, %s21, %s19
  %23 = sst [smem:[#allocation3]] %s0
  $region1: #{tpu_custom_call.1} parent=0
    #allocation4 [shape = 'u8[4096]{0}', space=vmem, size = 0x1000, scoped, tag = 'input window, operand 3, single buffered']
    #allocation5 [shape = 's32[1]{0}', space=sflag, size = 0x4, scoped, tag = 'scoped memory for tpu_custom_call.1']
    #allocation6 [shape = 's32[1]{0}', space=sflag, size = 0x4, scoped, tag = 'scoped memory for tpu_custom_call.1']
    #allocation7 [shape = 'u8[4096]{0}', space=vmem, size = 0x1000, scoped, tag = 'input window, operand 4, single buffered']
    #allocation8 [shape = 's32[1]{0}', space=sflag, size = 0x4, scoped, tag = 'scoped memory for tpu_custom_call.1']
    #allocation9 [shape = 'u8[4096]{0}', space=vmem, size = 0x1000, scoped, tag = 'input window, operand 5, single buffered']
    #allocation10 [shape = 'u8[4096]{0}', space=vmem, size = 0x1000, scoped, tag = 'input window, operand 6, single buffered']
    #allocation11 [shape = 's32[1]{0}', space=sflag, size = 0x4, scoped, tag = 'scoped memory for tpu_custom_call.1']
    #allocation12 [shape = 'u8[393216]{0}', space=vmem, size = 0x60000, scoped, tag = 'input window, operand 7, single buffered']
    #allocation13 [shape = 'u8[262144]{0}', space=vmem, size = 0x40000, scoped, tag = 'input window, operand 9, single buffered']
    #allocation14 [shape = 's32[1]{0}', space=sflag, size = 0x4, scoped, tag = 'scoped memory for tpu_custom_call.1']
    #allocation15 [shape = 'u8[32768]{0}', space=vmem, size = 0x8000, scoped, tag = 'input window, operand 11, single buffered']
    #allocation16 [shape = 'u8[4096]{0}', space=vmem, size = 0x1000, scoped, tag = 'output window, operand 0, single buffered']
    #allocation17 [shape = 'u8[4096]{0}', space=vmem, size = 0x1000, scoped, tag = 'output window, operand 1, single buffered']
    #allocation18 [shape = 's32[1]{0}', space=sflag, size = 0x4, scoped, tag = 'scoped memory for tpu_custom_call.1']
    #allocation19 [shape = 'u8[4096]{0}', space=vmem, size = 0x1000, scoped, tag = 'output window, operand 2, single buffered']
    #allocation20 [shape = 'u8[4096]{0}', space=vmem, size = 0x1000, scoped, tag = 'output window, operand 3, single buffered']
    #allocation21 [shape = 's32[1]{0}', space=sflag, size = 0x4, scoped, tag = 'scoped memory for tpu_custom_call.1']
    #allocation22 [shape = 'u8[4096]{0}', space=vmem, size = 0x1000, scoped, tag = 'output window, operand 4, single buffered']
    %24 = vsyncpa [#allocation5], 0
    %25 = vsyncpa [#allocation8], 0
    %26 = vsyncpa [#allocation11], 0
    %27 = vsyncpa [#allocation14], 0
    %28 = vsyncpa [#allocation6], 0
    %29 = vsyncpa [#allocation18], 0
    %30 = vsyncpa [#allocation21], 0
    // Predicated region
    $region2: #{tpu_custom_call.1} parent=1 // pred_check
      _
    $region3: #{tpu_custom_call.1} parent=1 // pred_check_branch
      %32 = sbr.rel (0) target = $region5
    $region4: #{tpu_custom_call.1} parent=1 // pred_region
      _
    $region5: #{tpu_custom_call.1} parent=1 // pred_fallthru
      _
    // Predicated region
    $region6: #{tpu_custom_call.1} parent=1 // pred_check
      _
    $region7: #{tpu_custom_call.1} parent=1 // pred_check_branch
      %34 = sbr.rel (0) target = $region9
    $region8: #{tpu_custom_call.1} parent=1 // pred_region
      _
    $region9: #{tpu_custom_call.1} parent=1 // pred_fallthru
      _
    // Predicated region
    $region10: #{tpu_custom_call.1} parent=1 // pred_check
      _
    $region11: #{tpu_custom_call.1} parent=1 // pred_check_branch
      %36 = sbr.rel (0) target = $region13
    $region12: #{tpu_custom_call.1} parent=1 // pred_region
      _
    $region13: #{tpu_custom_call.1} parent=1 // pred_fallthru
      _
    // Predicated region
    $region14: #{tpu_custom_call.1} parent=1 // pred_check
      _
    $region15: #{tpu_custom_call.1} parent=1 // pred_check_branch
      %38 = sbr.rel (0) target = $region17
    $region16: #{tpu_custom_call.1} parent=1 // pred_region
      %40 = vsyncadd [#allocation5], 0
      %s42 = sshll.u32 %s3, 4
      %s43 = int_to_ptr.hbm [resolvable:$true] %s42
      %s44 = sshll.u32 [#allocation4], 4
      %s45 = int_to_ptr.vmem [resolvable:$true] %s44
      %47 = dma.hbm_to_vmem [thread:$0]  %s43, 128, %s45, [#allocation5]
    $region17: #{tpu_custom_call.1} parent=1 // pred_fallthru
      _
    // Predicated region
    $region18: #{tpu_custom_call.1} parent=1 // pred_check
      _
    $region19: #{tpu_custom_call.1} parent=1 // pred_check_branch
      %49 = sbr.rel (0) target = $region21
    $region20: #{tpu_custom_call.1} parent=1 // pred_region
      %51 = vsyncadd [#allocation8], 0
      %s53 = sshll.u32 %s4, 4
      %s54 = int_to_ptr.hbm [resolvable:$true] %s53
      %s55 = sshll.u32 [#allocation7], 4
      %s56 = int_to_ptr.vmem [resolvable:$true] %s55
      %58 = dma.hbm_to_vmem [thread:$0]  %s54, 128, %s56, [#allocation8]
    $region21: #{tpu_custom_call.1} parent=1 // pred_fallthru
      _
    // Predicated region
    $region22: #{tpu_custom_call.1} parent=1 // pred_check
      _
    $region23: #{tpu_custom_call.1} parent=1 // pred_check_branch
      %60 = sbr.rel (0) target = $region25
    $region24: #{tpu_custom_call.1} parent=1 // pred_region
      %62 = vsyncadd [#allocation8], 0
      %s64 = sshll.u32 %s5, 4
      %s65 = int_to_ptr.hbm [resolvable:$true] %s64
      %s66 = sshll.u32 [#allocation9], 4
      %s67 = int_to_ptr.vmem [resolvable:$true] %s66
      %69 = dma.hbm_to_vmem [thread:$0]  %s65, 128, %s67, [#allocation8]
    $region25: #{tpu_custom_call.1} parent=1 // pred_fallthru
      _
    // Predicated region
    $region26: #{tpu_custom_call.1} parent=1 // pred_check
      _
    $region27: #{tpu_custom_call.1} parent=1 // pred_check_branch
      %71 = sbr.rel (0) target = $region29
    $region28: #{tpu_custom_call.1} parent=1 // pred_region
      %73 = vsyncadd [#allocation11], 0
      %s75 = sshll.u32 %s6, 4
      %s76 = int_to_ptr.hbm [resolvable:$true] %s75
      %s77 = sshll.u32 [#allocation10], 4
      %s78 = int_to_ptr.vmem [resolvable:$true] %s77
      %80 = dma.hbm_to_vmem [thread:$0]  %s76, 128, %s78, [#allocation11]
    $region29: #{tpu_custom_call.1} parent=1 // pred_fallthru
      _
    // Predicated region
    $region30: #{tpu_custom_call.1} parent=1 // pred_check
      _
    $region31: #{tpu_custom_call.1} parent=1 // pred_check_branch
      %82 = sbr.rel (0) target = $region33
    $region32: #{tpu_custom_call.1} parent=1 // pred_region
      %84 = vsyncadd [#allocation11], 0
      %s85 = sshll.u32 %s7, 4
      %s86 = int_to_ptr.hbm [resolvable:$true] %s85
      %s87 = sshll.u32 [#allocation12], 4
      %s88 = int_to_ptr.vmem [resolvable:$true] %s87
      %93 = dma.hbm_to_vmem [thread:$0]  %s86, 12288, %s88, [#allocation11], 256, 256, 16
    $region33: #{tpu_custom_call.1} parent=1 // pred_fallthru
      _
    // Predicated region
    $region34: #{tpu_custom_call.1} parent=1 // pred_check
      _
    $region35: #{tpu_custom_call.1} parent=1 // pred_check_branch
      %95 = sbr.rel (0) target = $region37
    $region36: #{tpu_custom_call.1} parent=1 // pred_region
      _
    $region37: #{tpu_custom_call.1} parent=1 // pred_fallthru
      _
    // Predicated region
    $region38: #{tpu_custom_call.1} parent=1 // pred_check
      _
    $region39: #{tpu_custom_call.1} parent=1 // pred_check_branch
      %97 = sbr.rel (0) target = $region41
    $region40: #{tpu_custom_call.1} parent=1 // pred_region
      %99 = vsyncadd [#allocation14], 0
      %s100 = sshll.u32 %s9, 4
      %s101 = int_to_ptr.hbm [resolvable:$true] %s100
      %s102 = sshll.u32 [#allocation13], 4
      %s103 = int_to_ptr.vmem [resolvable:$true] %s102
      %108 = dma.hbm_to_vmem [thread:$0]  %s101, 8192, %s103, [#allocation14], 256, 256, 16
    $region41: #{tpu_custom_call.1} parent=1 // pred_fallthru
      _
    // Predicated region
    $region42: #{tpu_custom_call.1} parent=1 // pred_check
      _
    $region43: #{tpu_custom_call.1} parent=1 // pred_check_branch
      %110 = sbr.rel (0) target = $region45
    $region44: #{tpu_custom_call.1} parent=1 // pred_region
      _
    $region45: #{tpu_custom_call.1} parent=1 // pred_fallthru
      _
    // Predicated region
    $region46: #{tpu_custom_call.1} parent=1 // pred_check
      _
    $region47: #{tpu_custom_call.1} parent=1 // pred_check_branch
      %112 = sbr.rel (0) target = $region49
    $region48: #{tpu_custom_call.1} parent=1 // pred_region
      %114 = vsyncadd [#allocation14], 0
      %s115 = sshll.u32 %s11, 4
      %s116 = int_to_ptr.hbm [resolvable:$true] %s115
      %s117 = sshll.u32 [#allocation15], 4
      %s118 = int_to_ptr.vmem [resolvable:$true] %s117
      %123 = dma.hbm_to_vmem [thread:$0]  %s116, 1024, %s118, [#allocation14], 64, 64, 4
    $region49: #{tpu_custom_call.1} parent=1 // pred_fallthru
      _
    // Predicated region
    $region50: #{tpu_custom_call.1} parent=1 // pred_check
      _
    $region51: #{tpu_custom_call.1} parent=1 // pred_check_branch
      %125 = sbr.rel (0) target = $region53
    $region52: #{tpu_custom_call.1} parent=1 // pred_region
      _
    $region53: #{tpu_custom_call.1} parent=1 // pred_fallthru
      _
    // Predicated region
    $region54: #{tpu_custom_call.1} parent=1 // pred_check
      _
    $region55: #{tpu_custom_call.1} parent=1 // pred_check_branch
      %127 = sbr.rel (0) target = $region57
    $region56: #{tpu_custom_call.1} parent=1 // pred_region
      %129 = dma.done [#allocation5], 128
    $region57: #{tpu_custom_call.1} parent=1 // pred_fallthru
      _
    // Predicated region
    $region58: #{tpu_custom_call.1} parent=1 // pred_check
      _
    $region59: #{tpu_custom_call.1} parent=1 // pred_check_branch
      %131 = sbr.rel (0) target = $region61
    $region60: #{tpu_custom_call.1} parent=1 // pred_region
      %133 = dma.done [#allocation8], 128
    $region61: #{tpu_custom_call.1} parent=1 // pred_fallthru
      _
    // Predicated region
    $region62: #{tpu_custom_call.1} parent=1 // pred_check
      _
    $region63: #{tpu_custom_call.1} parent=1 // pred_check_branch
      %135 = sbr.rel (0) target = $region65
    $region64: #{tpu_custom_call.1} parent=1 // pred_region
      %137 = dma.done [#allocation8], 128
    $region65: #{tpu_custom_call.1} parent=1 // pred_fallthru
      _
    // Predicated region
    $region66: #{tpu_custom_call.1} parent=1 // pred_check
      _
    $region67: #{tpu_custom_call.1} parent=1 // pred_check_branch
      %139 = sbr.rel (0) target = $region69
    $region68: #{tpu_custom_call.1} parent=1 // pred_region
      %141 = dma.done [#allocation11], 128
    $region69: #{tpu_custom_call.1} parent=1 // pred_fallthru
      _
    // Predicated region
    $region70: #{tpu_custom_call.1} parent=1 // pred_check
      _
    $region71: #{tpu_custom_call.1} parent=1 // pred_check_branch
      %143 = sbr.rel (0) target = $region73
    $region72: #{tpu_custom_call.1} parent=1 // pred_region
      %145 = dma.done [#allocation11], 12288
    $region73: #{tpu_custom_call.1} parent=1 // pred_fallthru
      _
    // Predicated region
    $region74: #{tpu_custom_call.1} parent=1 // pred_check
      _
    $region75: #{tpu_custom_call.1} parent=1 // pred_check_branch
      %147 = sbr.rel (0) target = $region77
    $region76: #{tpu_custom_call.1} parent=1 // pred_region
      %149 = dma.done [#allocation14], 8192
    $region77: #{tpu_custom_call.1} parent=1 // pred_fallthru
      _
    // Predicated region
    $region78: #{tpu_custom_call.1} parent=1 // pred_check
      _
    $region79: #{tpu_custom_call.1} parent=1 // pred_check_branch
      %151 = sbr.rel (0) target = $region81
    $region80: #{tpu_custom_call.1} parent=1 // pred_region
      %153 = dma.done [#allocation14], 1024
    $region81: #{tpu_custom_call.1} parent=1 // pred_fallthru
      _
    %p154 = scmp.eq.s32.totalorder 0, 0
    // Predicated region
    $region82: #{tpu_custom_call.1} parent=1 // pred_check
      %p155 = pneg %p154
    $region83: #{tpu_custom_call.1} parent=1 // pred_check_branch
      %157 = sbr.rel (%p155) target = $region85
    $region84: #{tpu_custom_call.1} parent=1 // pred_region
      %s158 = sld [smem:[#allocation3]]
      %p159 = scmp.ne.s32.totalorder %s158, 0
      %v160 = vld [vmem:[#allocation4] sm:$0xff]
      %s161 = scalar_select %p159, 1, 0
      %v162 = vstv %s161
      %vm163 = vcmp.eq.s32.totalorder %v162, 1
      %v164 = vsel %vm163, 0.0, %v160
      %v165 = vld [vmem:[#allocation7] sm:$0xff]
      %v166 = vsel %vm163, 0.0, %v165
      %v167 = vld [vmem:[#allocation9] sm:$0xff]
      %v168 = vsel %vm163, 0.0, %v167
      %v169 = vld [vmem:[#allocation10] sm:$0xff]
      %v170 = vsel %vm163, 0.0, %v169
      %v171 = vld [vmem:[%s1] sm:$0xf]
      %v172 = vld [vmem:[%s2] sm:$0xf]
      %v173 = vpack.c.bf16 %v164, %v164
      %v174 = vld [vmem:[#allocation12] sm:$0xff]
      %v175 = vld [vmem:[#allocation12 + $0x8] sm:$0xff]
      %v176 = vld [vmem:[#allocation12 + $0x10] sm:$0xff]
      %v177 = vld [vmem:[#allocation12 + $0x18] sm:$0xff]
      %v178 = vld [vmem:[#allocation12 + $0x20] sm:$0xff]
      %v179 = vld [vmem:[#allocation12 + $0x28] sm:$0xff]
      %v180 = vld [vmem:[#allocation12 + $0x30] sm:$0xff]
      %v181 = vld [vmem:[#allocation12 + $0x38] sm:$0xff]
      %v182 = vld [vmem:[#allocation12 + $0x40] sm:$0xff]
      %v183 = vld [vmem:[#allocation12 + $0x48] sm:$0xff]
      %v184 = vld [vmem:[#allocation12 + $0x50] sm:$0xff]
      %v185 = vld [vmem:[#allocation12 + $0x58] sm:$0xff]
      %v186 = vld [vmem:[#allocation12 + $0x60] sm:$0xff]
      %v187 = vld [vmem:[#allocation12 + $0x68] sm:$0xff]
      %v188 = vld [vmem:[#allocation12 + $0x70] sm:$0xff]
      %v189 = vld [vmem:[#allocation12 + $0x78] sm:$0xff]
      %v190 = vld [vmem:[#allocation12 + $0x80] sm:$0xff]
      %v191 = vld [vmem:[#allocation12 + $0x88] sm:$0xff]
      %v192 = vld [vmem:[#allocation12 + $0x90] sm:$0xff]
      %v193 = vld [vmem:[#allocation12 + $0x98] sm:$0xff]
      %v194 = vld [vmem:[#allocation12 + $0xa0] sm:$0xff]
      %v195 = vld [vmem:[#allocation12 + $0xa8] sm:$0xff]
      %v196 = vld [vmem:[#allocation12 + $0xb0] sm:$0xff]
      %v197 = vld [vmem:[#allocation12 + $0xb8] sm:$0xff]
      %v198 = vld [vmem:[#allocation12 + $0xc0] sm:$0xff]
      %v199 = vld [vmem:[#allocation12 + $0xc8] sm:$0xff]
      %v200 = vld [vmem:[#allocation12 + $0xd0] sm:$0xff]
      %v201 = vld [vmem:[#allocation12 + $0xd8] sm:$0xff]
      %v202 = vld [vmem:[#allocation12 + $0xe0] sm:$0xff]
      %v203 = vld [vmem:[#allocation12 + $0xe8] sm:$0xff]
      %v204 = vld [vmem:[#allocation12 + $0xf0] sm:$0xff]
      %v205 = vld [vmem:[#allocation12 + $0xf8] sm:$0xff]
      %v206 = vld [vmem:[#allocation12 + $0x100] sm:$0xff]
      %v207 = vld [vmem:[#allocation12 + $0x108] sm:$0xff]
      %v208 = vld [vmem:[#allocation12 + $0x110] sm:$0xff]
      %v209 = vld [vmem:[#allocation12 + $0x118] sm:$0xff]
      %v210 = vld [vmem:[#allocation12 + $0x120] sm:$0xff]
      %v211 = vld [vmem:[#allocation12 + $0x128] sm:$0xff]
      %v212 = vld [vmem:[#allocation12 + $0x130] sm:$0xff]
      %v213 = vld [vmem:[#allocation12 + $0x138] sm:$0xff]
      %v214 = vld [vmem:[#allocation12 + $0x140] sm:$0xff]
      %v215 = vld [vmem:[#allocation12 + $0x148] sm:$0xff]
      %v216 = vld [vmem:[#allocation12 + $0x150] sm:$0xff]
      %v217 = vld [vmem:[#allocation12 + $0x158] sm:$0xff]
      %v218 = vld [vmem:[#allocation12 + $0x160] sm:$0xff]
      %v219 = vld [vmem:[#allocation12 + $0x168] sm:$0xff]
      %v220 = vld [vmem:[#allocation12 + $0x170] sm:$0xff]
      %v221 = vld [vmem:[#allocation12 + $0x178] sm:$0xff]
      %v222 = vld [vmem:[#allocation12 + $0x180] sm:$0xff]
      %v223 = vld [vmem:[#allocation12 + $0x188] sm:$0xff]
      %v224 = vld [vmem:[#allocation12 + $0x190] sm:$0xff]
      %v225 = vld [vmem:[#allocation12 + $0x198] sm:$0xff]
      %v226 = vld [vmem:[#allocation12 + $0x1a0] sm:$0xff]
      %v227 = vld [vmem:[#allocation12 + $0x1a8] sm:$0xff]
      %v228 = vld [vmem:[#allocation12 + $0x1b0] sm:$0xff]
      %v229 = vld [vmem:[#allocation12 + $0x1b8] sm:$0xff]
      %v230 = vld [vmem:[#allocation12 + $0x1c0] sm:$0xff]
      %v231 = vld [vmem:[#allocation12 + $0x1c8] sm:$0xff]
      %v232 = vld [vmem:[#allocation12 + $0x1d0] sm:$0xff]
      %v233 = vld [vmem:[#allocation12 + $0x1d8] sm:$0xff]
      %v234 = vld [vmem:[#allocation12 + $0x1e0] sm:$0xff]
      %v235 = vld [vmem:[#allocation12 + $0x1e8] sm:$0xff]
      %v236 = vld [vmem:[#allocation12 + $0x1f0] sm:$0xff]
      %v237 = vld [vmem:[#allocation12 + $0x1f8] sm:$0xff]
      %v238 = vld [vmem:[#allocation12 + $0x200] sm:$0xff]
      %v239 = vld [vmem:[#allocation12 + $0x208] sm:$0xff]
      %v240 = vld [vmem:[#allocation12 + $0x210] sm:$0xff]
      %v241 = vld [vmem:[#allocation12 + $0x218] sm:$0xff]
      %v242 = vld [vmem:[#allocation12 + $0x220] sm:$0xff]
      %v243 = vld [vmem:[#allocation12 + $0x228] sm:$0xff]
      %v244 = vld [vmem:[#allocation12 + $0x230] sm:$0xff]
      %v245 = vld [vmem:[#allocation12 + $0x238] sm:$0xff]
      %v246 = vld [vmem:[#allocation12 + $0x240] sm:$0xff]
      %v247 = vld [vmem:[#allocation12 + $0x248] sm:$0xff]
      %v248 = vld [vmem:[#allocation12 + $0x250] sm:$0xff]
      %v249 = vld [vmem:[#allocation12 + $0x258] sm:$0xff]
      %v250 = vld [vmem:[#allocation12 + $0x260] sm:$0xff]
      %v251 = vld [vmem:[#allocation12 + $0x268] sm:$0xff]
      %v252 = vld [vmem:[#allocation12 + $0x270] sm:$0xff]
      %v253 = vld [vmem:[#allocation12 + $0x278] sm:$0xff]
      %v254 = vld [vmem:[#allocation12 + $0x280] sm:$0xff]
      %v255 = vld [vmem:[#allocation12 + $0x288] sm:$0xff]
      %v256 = vld [vmem:[#allocation12 + $0x290] sm:$0xff]
      %v257 = vld [vmem:[#allocation12 + $0x298] sm:$0xff]
      %v258 = vld [vmem:[#allocation12 + $0x2a0] sm:$0xff]
      %v259 = vld [vmem:[#allocation12 + $0x2a8] sm:$0xff]
      %v260 = vld [vmem:[#allocation12 + $0x2b0] sm:$0xff]
      %v261 = vld [vmem:[#allocation12 + $0x2b8] sm:$0xff]
      %v262 = vld [vmem:[#allocation12 + $0x2c0] sm:$0xff]
      %v263 = vld [vmem:[#allocation12 + $0x2c8] sm:$0xff]
      %v264 = vld [vmem:[#allocation12 + $0x2d0] sm:$0xff]
      %v265 = vld [vmem:[#allocation12 + $0x2d8] sm:$0xff]
      %v266 = vld [vmem:[#allocation12 + $0x2e0] sm:$0xff]
      %v267 = vld [vmem:[#allocation12 + $0x2e8] sm:$0xff]
      %v268 = vld [vmem:[#allocation12 + $0x2f0] sm:$0xff]
      %v269 = vld [vmem:[#allocation12 + $0x2f8] sm:$0xff]
      %v270 = vld [vmem:[%s8] sm:$0xf]
      %v272 = vperm.slane %v270, 0
      %v273 = vperm.slane %v270, 1
      %v274 = vperm.slane %v270, 2
      %v275 = vperm.slane %v270, 3
      %v376 = vunpack.c.l.b16 %v174
      %v377 = vunpack.c.h.b16 %v174
      %v378 = vunpack.c.l.b16 %v175
      %v379 = vunpack.c.h.b16 %v175
      %v380 = vunpack.c.l.b16 %v176
      %v381 = vunpack.c.h.b16 %v176
      %v382 = vunpack.c.l.b16 %v177
      %v383 = vunpack.c.h.b16 %v177
      %v384 = vunpack.c.l.b16 %v178
      %v385 = vunpack.c.h.b16 %v178
      %v386 = vunpack.c.l.b16 %v179
      %v387 = vunpack.c.h.b16 %v179
      %v388 = vunpack.c.l.b16 %v180
      %v389 = vunpack.c.h.b16 %v180
      %v390 = vunpack.c.l.b16 %v181
      %v391 = vunpack.c.h.b16 %v181
      %v392 = vunpack.c.l.b16 %v182
      %v393 = vunpack.c.h.b16 %v182
      %v394 = vunpack.c.l.b16 %v183
      %v395 = vunpack.c.h.b16 %v183
      %v396 = vunpack.c.l.b16 %v184
      %v397 = vunpack.c.h.b16 %v184
      %v398 = vunpack.c.l.b16 %v185
      %v399 = vunpack.c.h.b16 %v185
      %v400 = vunpack.c.l.b16 %v186
      %v401 = vunpack.c.h.b16 %v186
      %v402 = vunpack.c.l.b16 %v187
      %v403 = vunpack.c.h.b16 %v187
      %v404 = vunpack.c.l.b16 %v188
      %v405 = vunpack.c.h.b16 %v188
      %v406 = vunpack.c.l.b16 %v189
      %v407 = vunpack.c.h.b16 %v189
      %v408 = vunpack.c.l.b16 %v190
      %v409 = vunpack.c.h.b16 %v190
      %v410 = vunpack.c.l.b16 %v191
      %v411 = vunpack.c.h.b16 %v191
      %v412 = vunpack.c.l.b16 %v192
      %v413 = vunpack.c.h.b16 %v192
      %v414 = vunpack.c.l.b16 %v193
      %v415 = vunpack.c.h.b16 %v193
      %v416 = vunpack.c.l.b16 %v194
      %v417 = vunpack.c.h.b16 %v194
      %v418 = vunpack.c.l.b16 %v195
      %v419 = vunpack.c.h.b16 %v195
      %v420 = vunpack.c.l.b16 %v196
      %v421 = vunpack.c.h.b16 %v196
      %v422 = vunpack.c.l.b16 %v197
      %v423 = vunpack.c.h.b16 %v197
      %v424 = vunpack.c.l.b16 %v198
      %v425 = vunpack.c.h.b16 %v198
      %v426 = vunpack.c.l.b16 %v199
      %v427 = vunpack.c.h.b16 %v199
      %v428 = vunpack.c.l.b16 %v200
      %v429 = vunpack.c.h.b16 %v200
      %v430 = vunpack.c.l.b16 %v201
      %v431 = vunpack.c.h.b16 %v201
      %v432 = vunpack.c.l.b16 %v202
      %v433 = vunpack.c.h.b16 %v202
      %v434 = vunpack.c.l.b16 %v203
      %v435 = vunpack.c.h.b16 %v203
      %v436 = vunpack.c.l.b16 %v204
      %v437 = vunpack.c.h.b16 %v204
      %v438 = vunpack.c.l.b16 %v205
      %v439 = vunpack.c.h.b16 %v205
      %v440 = vunpack.c.l.b16 %v206
      %v441 = vunpack.c.h.b16 %v206
      %v442 = vunpack.c.l.b16 %v207
      %v443 = vunpack.c.h.b16 %v207
      %v444 = vunpack.c.l.b16 %v208
      %v445 = vunpack.c.h.b16 %v208
      %v446 = vunpack.c.l.b16 %v209
      %v447 = vunpack.c.h.b16 %v209
      %v448 = vunpack.c.l.b16 %v210
      %v449 = vunpack.c.h.b16 %v210
      %v450 = vunpack.c.l.b16 %v211
      %v451 = vunpack.c.h.b16 %v211
      %v452 = vunpack.c.l.b16 %v212
      %v453 = vunpack.c.h.b16 %v212
      %v454 = vunpack.c.l.b16 %v213
      %v455 = vunpack.c.h.b16 %v213
      %v456 = vunpack.c.l.b16 %v214
      %v457 = vunpack.c.h.b16 %v214
      %v458 = vunpack.c.l.b16 %v215
      %v459 = vunpack.c.h.b16 %v215
      %v460 = vunpack.c.l.b16 %v216
      %v461 = vunpack.c.h.b16 %v216
      %v462 = vunpack.c.l.b16 %v217
      %v463 = vunpack.c.h.b16 %v217
      %v464 = vunpack.c.l.b16 %v218
      %v465 = vunpack.c.h.b16 %v218
      %v466 = vunpack.c.l.b16 %v219
      %v467 = vunpack.c.h.b16 %v219
      %v468 = vunpack.c.l.b16 %v220
      %v469 = vunpack.c.h.b16 %v220
      %v470 = vunpack.c.l.b16 %v221
      %v471 = vunpack.c.h.b16 %v221
      %v472 = vunpack.c.l.b16 %v222
      %v473 = vunpack.c.h.b16 %v222
      %v474 = vunpack.c.l.b16 %v223
      %v475 = vunpack.c.h.b16 %v223
      %v476 = vunpack.c.l.b16 %v224
      %v477 = vunpack.c.h.b16 %v224
      %v478 = vunpack.c.l.b16 %v225
      %v479 = vunpack.c.h.b16 %v225
      %v480 = vunpack.c.l.b16 %v226
      %v481 = vunpack.c.h.b16 %v226
      %v482 = vunpack.c.l.b16 %v227
      %v483 = vunpack.c.h.b16 %v227
      %v484 = vunpack.c.l.b16 %v228
      %v485 = vunpack.c.h.b16 %v228
      %v486 = vunpack.c.l.b16 %v229
      %v487 = vunpack.c.h.b16 %v229
      %v488 = vunpack.c.l.b16 %v230
      %v489 = vunpack.c.h.b16 %v230
      %v490 = vunpack.c.l.b16 %v231
      %v491 = vunpack.c.h.b16 %v231
      %v492 = vunpack.c.l.b16 %v232
      %v493 = vunpack.c.h.b16 %v232
      %v494 = vunpack.c.l.b16 %v233
      %v495 = vunpack.c.h.b16 %v233
      %v496 = vunpack.c.l.b16 %v234
      %v497 = vunpack.c.h.b16 %v234
      %v498 = vunpack.c.l.b16 %v235
      %v499 = vunpack.c.h.b16 %v235
      %v500 = vunpack.c.l.b16 %v236
      %v501 = vunpack.c.h.b16 %v236
      %v502 = vunpack.c.l.b16 %v237
      %v503 = vunpack.c.h.b16 %v237
      %v504 = vunpack.c.l.b16 %v238
      %v505 = vunpack.c.h.b16 %v238
      %v506 = vunpack.c.l.b16 %v239
      %v507 = vunpack.c.h.b16 %v239
      %v508 = vunpack.c.l.b16 %v240
      %v509 = vunpack.c.h.b16 %v240
      %v510 = vunpack.c.l.b16 %v241
      %v511 = vunpack.c.h.b16 %v241
      %v512 = vunpack.c.l.b16 %v242
      %v513 = vunpack.c.h.b16 %v242
      %v514 = vunpack.c.l.b16 %v243
      %v515 = vunpack.c.h.b16 %v243
      %v516 = vunpack.c.l.b16 %v244
      %v517 = vunpack.c.h.b16 %v244
      %v518 = vunpack.c.l.b16 %v245
      %v519 = vunpack.c.h.b16 %v245
      %v520 = vunpack.c.l.b16 %v246
      %v521 = vunpack.c.h.b16 %v246
      %v522 = vunpack.c.l.b16 %v247
      %v523 = vunpack.c.h.b16 %v247
      %v524 = vunpack.c.l.b16 %v248
      %v525 = vunpack.c.h.b16 %v248
      %v526 = vunpack.c.l.b16 %v249
      %v527 = vunpack.c.h.b16 %v249
      %v528 = vunpack.c.l.b16 %v250
      %v529 = vunpack.c.h.b16 %v250
      %v530 = vunpack.c.l.b16 %v251
      %v531 = vunpack.c.h.b16 %v251
      %v532 = vunpack.c.l.b16 %v252
      %v533 = vunpack.c.h.b16 %v252
      %v534 = vunpack.c.l.b16 %v253
      %v535 = vunpack.c.h.b16 %v253
      %v536 = vunpack.c.l.b16 %v254
      %v537 = vunpack.c.h.b16 %v254
      %v538 = vunpack.c.l.b16 %v255
      %v539 = vunpack.c.h.b16 %v255
      %v540 = vunpack.c.l.b16 %v256
      %v541 = vunpack.c.h.b16 %v256
      %v542 = vunpack.c.l.b16 %v257
      %v543 = vunpack.c.h.b16 %v257
      %v544 = vunpack.c.l.b16 %v258
      %v545 = vunpack.c.h.b16 %v258
      %v546 = vunpack.c.l.b16 %v259
      %v547 = vunpack.c.h.b16 %v259
      %v548 = vunpack.c.l.b16 %v260
      %v549 = vunpack.c.h.b16 %v260
      %v550 = vunpack.c.l.b16 %v261
      %v551 = vunpack.c.h.b16 %v261
      %v552 = vunpack.c.l.b16 %v262
      %v553 = vunpack.c.h.b16 %v262
      %v554 = vunpack.c.l.b16 %v263
      %v555 = vunpack.c.h.b16 %v263
      %v556 = vunpack.c.l.b16 %v264
      %v557 = vunpack.c.h.b16 %v264
      %v558 = vunpack.c.l.b16 %v265
      %v559 = vunpack.c.h.b16 %v265
      %v560 = vunpack.c.l.b16 %v266
      %v561 = vunpack.c.h.b16 %v266
      %v562 = vunpack.c.l.b16 %v267
      %v563 = vunpack.c.h.b16 %v267
      %v564 = vunpack.c.l.b16 %v268
      %v565 = vunpack.c.h.b16 %v268
      %v566 = vunpack.c.l.b16 %v269
      %v567 = vunpack.c.h.b16 %v269
      %v568 = vpack.c.b16 %v380, %v376
      %v569 = vpack.c.b16 %v381, %v377
      %v570 = vpack.c.b16 %v382, %v378
      %v571 = vpack.c.b16 %v383, %v379
      %v572 = vpack.c.b16 %v388, %v384
      %v573 = vpack.c.b16 %v389, %v385
      %v574 = vpack.c.b16 %v390, %v386
      %v575 = vpack.c.b16 %v391, %v387
      %v576 = vpack.c.b16 %v396, %v392
      %v577 = vpack.c.b16 %v397, %v393
      %v578 = vpack.c.b16 %v398, %v394
      %v579 = vpack.c.b16 %v399, %v395
      %v580 = vpack.c.b16 %v404, %v400
      %v581 = vpack.c.b16 %v405, %v401
      %v582 = vpack.c.b16 %v406, %v402
      %v583 = vpack.c.b16 %v407, %v403
      %v584 = vpack.c.b16 %v412, %v408
      %v585 = vpack.c.b16 %v413, %v409
      %v586 = vpack.c.b16 %v414, %v410
      %v587 = vpack.c.b16 %v415, %v411
      %v588 = vpack.c.b16 %v420, %v416
      %v589 = vpack.c.b16 %v421, %v417
      %v590 = vpack.c.b16 %v422, %v418
      %v591 = vpack.c.b16 %v423, %v419
      %v592 = vpack.c.b16 %v428, %v424
      %v593 = vpack.c.b16 %v429, %v425
      %v594 = vpack.c.b16 %v430, %v426
      %v595 = vpack.c.b16 %v431, %v427
      %v596 = vpack.c.b16 %v436, %v432
      %v597 = vpack.c.b16 %v437, %v433
      %v598 = vpack.c.b16 %v438, %v434
      %v599 = vpack.c.b16 %v439, %v435
      %v600 = vpack.c.b16 %v444, %v440
      %v601 = vpack.c.b16 %v445, %v441
      %v602 = vpack.c.b16 %v446, %v442
      %v603 = vpack.c.b16 %v447, %v443
      %v604 = vpack.c.b16 %v452, %v448
      %v605 = vpack.c.b16 %v453, %v449
      %v606 = vpack.c.b16 %v454, %v450
      %v607 = vpack.c.b16 %v455, %v451
      %v608 = vpack.c.b16 %v460, %v456
      %v609 = vpack.c.b16 %v461, %v457
      %v610 = vpack.c.b16 %v462, %v458
      %v611 = vpack.c.b16 %v463, %v459
      %v612 = vpack.c.b16 %v468, %v464
      %v613 = vpack.c.b16 %v469, %v465
      %v614 = vpack.c.b16 %v470, %v466
      %v615 = vpack.c.b16 %v471, %v467
      %v616 = vpack.c.b16 %v476, %v472
      %v617 = vpack.c.b16 %v477, %v473
      %v618 = vpack.c.b16 %v478, %v474
      %v619 = vpack.c.b16 %v479, %v475
      %v620 = vpack.c.b16 %v484, %v480
      %v621 = vpack.c.b16 %v485, %v481
      %v622 = vpack.c.b16 %v486, %v482
      %v623 = vpack.c.b16 %v487, %v483
      %v624 = vpack.c.b16 %v492, %v488
      %v625 = vpack.c.b16 %v493, %v489
      %v626 = vpack.c.b16 %v494, %v490
      %v627 = vpack.c.b16 %v495, %v491
      %v628 = vpack.c.b16 %v500, %v496
      %v629 = vpack.c.b16 %v501, %v497
      %v630 = vpack.c.b16 %v502, %v498
      %v631 = vpack.c.b16 %v503, %v499
      %v632 = vpack.c.b16 %v508, %v504
      %v633 = vpack.c.b16 %v509, %v505
      %v634 = vpack.c.b16 %v510, %v506
      %v635 = vpack.c.b16 %v511, %v507
      %v636 = vpack.c.b16 %v516, %v512
      %v637 = vpack.c.b16 %v517, %v513
      %v638 = vpack.c.b16 %v518, %v514
      %v639 = vpack.c.b16 %v519, %v515
      %v640 = vpack.c.b16 %v524, %v520
      %v641 = vpack.c.b16 %v525, %v521
      %v642 = vpack.c.b16 %v526, %v522
      %v643 = vpack.c.b16 %v527, %v523
      %v644 = vpack.c.b16 %v532, %v528
      %v645 = vpack.c.b16 %v533, %v529
      %v646 = vpack.c.b16 %v534, %v530
      %v647 = vpack.c.b16 %v535, %v531
      %v648 = vpack.c.b16 %v540, %v536
      %v649 = vpack.c.b16 %v541, %v537
      %v650 = vpack.c.b16 %v542, %v538
      %v651 = vpack.c.b16 %v543, %v539
      %v652 = vpack.c.b16 %v548, %v544
      %v653 = vpack.c.b16 %v549, %v545
      %v654 = vpack.c.b16 %v550, %v546
      %v655 = vpack.c.b16 %v551, %v547
      %v656 = vpack.c.b16 %v556, %v552
      %v657 = vpack.c.b16 %v557, %v553
      %v658 = vpack.c.b16 %v558, %v554
      %v659 = vpack.c.b16 %v559, %v555
      %v660 = vpack.c.b16 %v564, %v560
      %v661 = vpack.c.b16 %v565, %v561
      %v662 = vpack.c.b16 %v566, %v562
      %v663 = vpack.c.b16 %v567, %v563
      %760 = vmatpush.bf16.msra.mxu0 %v596
      %761 = vmatpush.bf16.msra.mxu0 %v592
      %762 = vmatpush.bf16.msra.mxu0 %v588
      %763 = vmatpush.bf16.msra.mxu0 %v584
      %764 = vmatpush.bf16.msra.mxu0 %v580
      %765 = vmatpush.bf16.msra.mxu0 %v576
      %766 = vmatpush.bf16.msra.mxu0 %v572
      %767 = vmatpush.bf16.msra.mxu0 %v568
      %768 = vmatmul.bf16.gmra.mxu0 %v171
      %v769 = vpop.f32.mrf.mxu0
      %v770 = vadd.f32 %v272, %v769
      %v771 = vpop.f32.mrf.mxu0
      %772 = vdwg.mxu0
      %773 = vmatpush.bf16.msra.mxu0 %v628
      %774 = vmatpush.bf16.msra.mxu0 %v624
      %775 = vmatpush.bf16.msra.mxu0 %v620
      %776 = vmatpush.bf16.msra.mxu0 %v616
      %777 = vmatpush.bf16.msra.mxu0 %v612
      %778 = vmatpush.bf16.msra.mxu0 %v608
      %779 = vmatpush.bf16.msra.mxu0 %v604
      %780 = vmatpush.bf16.msra.mxu0 %v600
      %781 = vmatmul.bf16.gmra.mxu0 %v172
      %v782 = vpop.f32.mrf.mxu0
      %v783 = vadd.f32 %v770, %v782
      %v784 = vpop.f32.mrf.mxu0
      %785 = vdwg.mxu0
      %786 = vmatpush.bf16.msra.mxu0 %v660
      %787 = vmatpush.bf16.msra.mxu0 %v656
      %788 = vmatpush.bf16.msra.mxu0 %v652
      %789 = vmatpush.bf16.msra.mxu0 %v648
      %790 = vmatpush.bf16.msra.mxu0 %v644
      %791 = vmatpush.bf16.msra.mxu0 %v640
      %792 = vmatpush.bf16.msra.mxu0 %v636
      %793 = vmatpush.bf16.msra.mxu0 %v632
      %794 = vmatmul.bf16.gmra.mxu0 %v173
      %v795 = vpop.f32.mrf.mxu0
      %v796 = vadd.f32 %v783, %v795
      %v797 = vpop.f32.mrf.mxu0
      %798 = vdwg.mxu0
      %799 = vmatpush.bf16.msra.mxu0 %v597
      %800 = vmatpush.bf16.msra.mxu0 %v593
      %801 = vmatpush.bf16.msra.mxu0 %v589
      %802 = vmatpush.bf16.msra.mxu0 %v585
      %803 = vmatpush.bf16.msra.mxu0 %v581
      %804 = vmatpush.bf16.msra.mxu0 %v577
      %805 = vmatpush.bf16.msra.mxu0 %v573
      %806 = vmatpush.bf16.msra.mxu0 %v569
      %807 = vmatmul.bf16.gmra.mxu0 %v171
      %v808 = vpop.f32.mrf.mxu0
      %v809 = vadd.f32 %v273, %v808
      %v810 = vpop.f32.mrf.mxu0
      %811 = vdwg.mxu0
      %812 = vmatpush.bf16.msra.mxu0 %v629
      %813 = vmatpush.bf16.msra.mxu0 %v625
      %814 = vmatpush.bf16.msra.mxu0 %v621
      %815 = vmatpush.bf16.msra.mxu0 %v617
      %816 = vmatpush.bf16.msra.mxu0 %v613
      %817 = vmatpush.bf16.msra.mxu0 %v609
      %818 = vmatpush.bf16.msra.mxu0 %v605
      %819 = vmatpush.bf16.msra.mxu0 %v601
      %820 = vmatmul.bf16.gmra.mxu0 %v172
      %v821 = vpop.f32.mrf.mxu0
      %v822 = vadd.f32 %v809, %v821
      %v823 = vpop.f32.mrf.mxu0
      %824 = vdwg.mxu0
      %825 = vmatpush.bf16.msra.mxu0 %v661
      %826 = vmatpush.bf16.msra.mxu0 %v657
      %827 = vmatpush.bf16.msra.mxu0 %v653
      %828 = vmatpush.bf16.msra.mxu0 %v649
      %829 = vmatpush.bf16.msra.mxu0 %v645
      %830 = vmatpush.bf16.msra.mxu0 %v641
      %831 = vmatpush.bf16.msra.mxu0 %v637
      %832 = vmatpush.bf16.msra.mxu0 %v633
      %833 = vmatmul.bf16.gmra.mxu0 %v173
      %v834 = vpop.f32.mrf.mxu0
      %v835 = vadd.f32 %v822, %v834
      %v836 = vpop.f32.mrf.mxu0
      %837 = vdwg.mxu0
      %838 = vmatpush.bf16.msra.mxu0 %v598
      %839 = vmatpush.bf16.msra.mxu0 %v594
      %840 = vmatpush.bf16.msra.mxu0 %v590
      %841 = vmatpush.bf16.msra.mxu0 %v586
      %842 = vmatpush.bf16.msra.mxu0 %v582
      %843 = vmatpush.bf16.msra.mxu0 %v578
      %844 = vmatpush.bf16.msra.mxu0 %v574
      %845 = vmatpush.bf16.msra.mxu0 %v570
      %846 = vmatmul.bf16.gmra.mxu0 %v171
      %v847 = vpop.f32.mrf.mxu0
      %v848 = vadd.f32 %v274, %v847
      %v849 = vpop.f32.mrf.mxu0
      %850 = vdwg.mxu0
      %851 = vmatpush.bf16.msra.mxu0 %v630
      %852 = vmatpush.bf16.msra.mxu0 %v626
      %853 = vmatpush.bf16.msra.mxu0 %v622
      %854 = vmatpush.bf16.msra.mxu0 %v618
      %855 = vmatpush.bf16.msra.mxu0 %v614
      %856 = vmatpush.bf16.msra.mxu0 %v610
      %857 = vmatpush.bf16.msra.mxu0 %v606
      %858 = vmatpush.bf16.msra.mxu0 %v602
      %859 = vmatmul.bf16.gmra.mxu0 %v172
      %v860 = vpop.f32.mrf.mxu0
      %v861 = vadd.f32 %v848, %v860
      %v862 = vpop.f32.mrf.mxu0
      %863 = vdwg.mxu0
      %864 = vmatpush.bf16.msra.mxu0 %v662
      %865 = vmatpush.bf16.msra.mxu0 %v658
      %866 = vmatpush.bf16.msra.mxu0 %v654
      %867 = vmatpush.bf16.msra.mxu0 %v650
      %868 = vmatpush.bf16.msra.mxu0 %v646
      %869 = vmatpush.bf16.msra.mxu0 %v642
      %870 = vmatpush.bf16.msra.mxu0 %v638
      %871 = vmatpush.bf16.msra.mxu0 %v634
      %872 = vmatmul.bf16.gmra.mxu0 %v173
      %v873 = vpop.f32.mrf.mxu0
      %v874 = vadd.f32 %v861, %v873
      %v875 = vpop.f32.mrf.mxu0
      %876 = vdwg.mxu0
      %877 = vmatpush.bf16.msra.mxu0 %v599
      %878 = vmatpush.bf16.msra.mxu0 %v595
      %879 = vmatpush.bf16.msra.mxu0 %v591
      %880 = vmatpush.bf16.msra.mxu0 %v587
      %881 = vmatpush.bf16.msra.mxu0 %v583
      %882 = vmatpush.bf16.msra.mxu0 %v579
      %883 = vmatpush.bf16.msra.mxu0 %v575
      %884 = vmatpush.bf16.msra.mxu0 %v571
      %885 = vmatmul.bf16.gmra.mxu0 %v171
      %v886 = vpop.f32.mrf.mxu0
      %v887 = vadd.f32 %v275, %v886
      %v888 = vpop.f32.mrf.mxu0
      %889 = vdwg.mxu0
      %890 = vmatpush.bf16.msra.mxu0 %v631
      %891 = vmatpush.bf16.msra.mxu0 %v627
      %892 = vmatpush.bf16.msra.mxu0 %v623
      %893 = vmatpush.bf16.msra.mxu0 %v619
      %894 = vmatpush.bf16.msra.mxu0 %v615
      %895 = vmatpush.bf16.msra.mxu0 %v611
      %896 = vmatpush.bf16.msra.mxu0 %v607
      %897 = vmatpush.bf16.msra.mxu0 %v603
      %898 = vmatmul.bf16.gmra.mxu0 %v172
      %v899 = vpop.f32.mrf.mxu0
      %v900 = vadd.f32 %v887, %v899
      %v901 = vpop.f32.mrf.mxu0
      %902 = vdwg.mxu0
      %903 = vmatpush.bf16.msra.mxu0 %v663
      %904 = vmatpush.bf16.msra.mxu0 %v659
      %905 = vmatpush.bf16.msra.mxu0 %v655
      %906 = vmatpush.bf16.msra.mxu0 %v651
      %907 = vmatpush.bf16.msra.mxu0 %v647
      %908 = vmatpush.bf16.msra.mxu0 %v643
      %909 = vmatpush.bf16.msra.mxu0 %v639
      %910 = vmatpush.bf16.msra.mxu0 %v635
      %911 = vmatmul.bf16.gmra.mxu0 %v173
      %v912 = vpop.f32.mrf.mxu0
      %v913 = vadd.f32 %v900, %v912
      %v914 = vpop.f32.mrf.mxu0
      %915 = vdwg.mxu0
      %v916 = vxor.u32 %v796, 2147483648
      %v917 = vmul.f32 %v916, 1.442695
      %v918 = vpow.pop %v917
      %v919 = vadd.f32 %v918, 1.0
      %v920 = vrcp.pop %v919
      %v921 = vmul.f32 %v919, %v920
      %v922 = vsub.f32 1.0, %v921
      %v923 = vmul.f32 %v920, %v922
      %v924 = vadd.f32 %v920, %v923
      %vm925 = vweird.f32 %v919
      %vm926 = vweird.f32 %v920
      %vm927 = vmor %vm925, %vm926
      %v928 = vsel %vm927, %v920, %v924
      %v929 = vand.u32 2147483647, %v919
      %vm930 = vcmp.eq.f32.partialorder %v929, 8.507059e+37
      %v931 = vand.u32 %v919, 2147483648
      %v932 = vor.u32 1.1754944e-38, %v931
      %v933 = vsel %vm930, %v932, %v928
      %v934 = vmul.f32 1.0, %v933
      %v935 = vxor.u32 %v835, 2147483648
      %v936 = vmul.f32 %v935, 1.442695
      %v937 = vpow.pop %v936
      %v938 = vadd.f32 %v937, 1.0
      %v939 = vrcp.pop %v938
      %v940 = vmul.f32 %v938, %v939
      %v941 = vsub.f32 1.0, %v940
      %v942 = vmul.f32 %v939, %v941
      %v943 = vadd.f32 %v939, %v942
      %vm944 = vweird.f32 %v938
      %vm945 = vweird.f32 %v939
      %vm946 = vmor %vm944, %vm945
      %v947 = vsel %vm946, %v939, %v943
      %v948 = vand.u32 2147483647, %v938
      %vm949 = vcmp.eq.f32.partialorder %v948, 8.507059e+37
      %v950 = vand.u32 %v938, 2147483648
      %v951 = vor.u32 1.1754944e-38, %v950
      %v952 = vsel %vm949, %v951, %v947
      %v953 = vmul.f32 1.0, %v952
      %v954 = vtanh.pop %v874
      %v955 = vxor.u32 %v913, 2147483648
      %v956 = vmul.f32 %v955, 1.442695
      %v957 = vpow.pop %v956
      %v958 = vadd.f32 %v957, 1.0
      %v959 = vrcp.pop %v958
      %v960 = vmul.f32 %v958, %v959
      %v961 = vsub.f32 1.0, %v960
      %v962 = vmul.f32 %v959, %v961
      %v963 = vadd.f32 %v959, %v962
      %vm964 = vweird.f32 %v958
      %vm965 = vweird.f32 %v959
      %vm966 = vmor %vm964, %vm965
      %v967 = vsel %vm966, %v959, %v963
      %v968 = vand.u32 2147483647, %v958
      %vm969 = vcmp.eq.f32.partialorder %v968, 8.507059e+37
      %v970 = vand.u32 %v958, 2147483648
      %v971 = vor.u32 1.1754944e-38, %v970
      %v972 = vsel %vm969, %v971, %v967
      %v973 = vmul.f32 1.0, %v972
      %v974 = vmul.f32 %v953, %v166
      %v975 = vmul.f32 %v934, %v954
      %v976 = vadd.f32 %v974, %v975
      %v977 = vtanh.pop %v976
      %v978 = vmul.f32 %v973, %v977
      %v979 = vpack.c.bf16 %v978, %v978
      %v980 = vpack.c.bf16 %v168, %v168
      %v981 = vld [vmem:[#allocation13] sm:$0xff]
      %v982 = vld [vmem:[#allocation13 + $0x8] sm:$0xff]
      %v983 = vld [vmem:[#allocation13 + $0x10] sm:$0xff]
      %v984 = vld [vmem:[#allocation13 + $0x18] sm:$0xff]
      %v985 = vld [vmem:[#allocation13 + $0x20] sm:$0xff]
      %v986 = vld [vmem:[#allocation13 + $0x28] sm:$0xff]
      %v987 = vld [vmem:[#allocation13 + $0x30] sm:$0xff]
      %v988 = vld [vmem:[#allocation13 + $0x38] sm:$0xff]
      %v989 = vld [vmem:[#allocation13 + $0x40] sm:$0xff]
      %v990 = vld [vmem:[#allocation13 + $0x48] sm:$0xff]
      %v991 = vld [vmem:[#allocation13 + $0x50] sm:$0xff]
      %v992 = vld [vmem:[#allocation13 + $0x58] sm:$0xff]
      %v993 = vld [vmem:[#allocation13 + $0x60] sm:$0xff]
      %v994 = vld [vmem:[#allocation13 + $0x68] sm:$0xff]
      %v995 = vld [vmem:[#allocation13 + $0x70] sm:$0xff]
      %v996 = vld [vmem:[#allocation13 + $0x78] sm:$0xff]
      %v997 = vld [vmem:[#allocation13 + $0x80] sm:$0xff]
      %v998 = vld [vmem:[#allocation13 + $0x88] sm:$0xff]
      %v999 = vld [vmem:[#allocation13 + $0x90] sm:$0xff]
      %v1000 = vld [vmem:[#allocation13 + $0x98] sm:$0xff]
      %v1001 = vld [vmem:[#allocation13 + $0xa0] sm:$0xff]
      %v1002 = vld [vmem:[#allocation13 + $0xa8] sm:$0xff]
      %v1003 = vld [vmem:[#allocation13 + $0xb0] sm:$0xff]
      %v1004 = vld [vmem:[#allocation13 + $0xb8] sm:$0xff]
      %v1005 = vld [vmem:[#allocation13 + $0xc0] sm:$0xff]
      %v1006 = vld [vmem:[#allocation13 + $0xc8] sm:$0xff]
      %v1007 = vld [vmem:[#allocation13 + $0xd0] sm:$0xff]
      %v1008 = vld [vmem:[#allocation13 + $0xd8] sm:$0xff]
      %v1009 = vld [vmem:[#allocation13 + $0xe0] sm:$0xff]
      %v1010 = vld [vmem:[#allocation13 + $0xe8] sm:$0xff]
      %v1011 = vld [vmem:[#allocation13 + $0xf0] sm:$0xff]
      %v1012 = vld [vmem:[#allocation13 + $0xf8] sm:$0xff]
      %v1013 = vld [vmem:[#allocation13 + $0x100] sm:$0xff]
      %v1014 = vld [vmem:[#allocation13 + $0x108] sm:$0xff]
      %v1015 = vld [vmem:[#allocation13 + $0x110] sm:$0xff]
      %v1016 = vld [vmem:[#allocation13 + $0x118] sm:$0xff]
      %v1017 = vld [vmem:[#allocation13 + $0x120] sm:$0xff]
      %v1018 = vld [vmem:[#allocation13 + $0x128] sm:$0xff]
      %v1019 = vld [vmem:[#allocation13 + $0x130] sm:$0xff]
      %v1020 = vld [vmem:[#allocation13 + $0x138] sm:$0xff]
      %v1021 = vld [vmem:[#allocation13 + $0x140] sm:$0xff]
      %v1022 = vld [vmem:[#allocation13 + $0x148] sm:$0xff]
      %v1023 = vld [vmem:[#allocation13 + $0x150] sm:$0xff]
      %v1024 = vld [vmem:[#allocation13 + $0x158] sm:$0xff]
      %v1025 = vld [vmem:[#allocation13 + $0x160] sm:$0xff]
      %v1026 = vld [vmem:[#allocation13 + $0x168] sm:$0xff]
      %v1027 = vld [vmem:[#allocation13 + $0x170] sm:$0xff]
      %v1028 = vld [vmem:[#allocation13 + $0x178] sm:$0xff]
      %v1029 = vld [vmem:[#allocation13 + $0x180] sm:$0xff]
      %v1030 = vld [vmem:[#allocation13 + $0x188] sm:$0xff]
      %v1031 = vld [vmem:[#allocation13 + $0x190] sm:$0xff]
      %v1032 = vld [vmem:[#allocation13 + $0x198] sm:$0xff]
      %v1033 = vld [vmem:[#allocation13 + $0x1a0] sm:$0xff]
      %v1034 = vld [vmem:[#allocation13 + $0x1a8] sm:$0xff]
      %v1035 = vld [vmem:[#allocation13 + $0x1b0] sm:$0xff]
      %v1036 = vld [vmem:[#allocation13 + $0x1b8] sm:$0xff]
      %v1037 = vld [vmem:[#allocation13 + $0x1c0] sm:$0xff]
      %v1038 = vld [vmem:[#allocation13 + $0x1c8] sm:$0xff]
      %v1039 = vld [vmem:[#allocation13 + $0x1d0] sm:$0xff]
      %v1040 = vld [vmem:[#allocation13 + $0x1d8] sm:$0xff]
      %v1041 = vld [vmem:[#allocation13 + $0x1e0] sm:$0xff]
      %v1042 = vld [vmem:[#allocation13 + $0x1e8] sm:$0xff]
      %v1043 = vld [vmem:[#allocation13 + $0x1f0] sm:$0xff]
      %v1044 = vld [vmem:[#allocation13 + $0x1f8] sm:$0xff]
      %v1045 = vld [vmem:[%s10] sm:$0xf]
      %v1047 = vperm.slane %v1045, 0
      %v1048 = vperm.slane %v1045, 1
      %v1049 = vperm.slane %v1045, 2
      %v1050 = vperm.slane %v1045, 3
      %v1119 = vunpack.c.l.b16 %v981
      %v1120 = vunpack.c.h.b16 %v981
      %v1121 = vunpack.c.l.b16 %v982
      %v1122 = vunpack.c.h.b16 %v982
      %v1123 = vunpack.c.l.b16 %v983
      %v1124 = vunpack.c.h.b16 %v983
      %v1125 = vunpack.c.l.b16 %v984
      %v1126 = vunpack.c.h.b16 %v984
      %v1127 = vunpack.c.l.b16 %v985
      %v1128 = vunpack.c.h.b16 %v985
      %v1129 = vunpack.c.l.b16 %v986
      %v1130 = vunpack.c.h.b16 %v986
      %v1131 = vunpack.c.l.b16 %v987
      %v1132 = vunpack.c.h.b16 %v987
      %v1133 = vunpack.c.l.b16 %v988
      %v1134 = vunpack.c.h.b16 %v988
      %v1135 = vunpack.c.l.b16 %v989
      %v1136 = vunpack.c.h.b16 %v989
      %v1137 = vunpack.c.l.b16 %v990
      %v1138 = vunpack.c.h.b16 %v990
      %v1139 = vunpack.c.l.b16 %v991
      %v1140 = vunpack.c.h.b16 %v991
      %v1141 = vunpack.c.l.b16 %v992
      %v1142 = vunpack.c.h.b16 %v992
      %v1143 = vunpack.c.l.b16 %v993
      %v1144 = vunpack.c.h.b16 %v993
      %v1145 = vunpack.c.l.b16 %v994
      %v1146 = vunpack.c.h.b16 %v994
      %v1147 = vunpack.c.l.b16 %v995
      %v1148 = vunpack.c.h.b16 %v995
      %v1149 = vunpack.c.l.b16 %v996
      %v1150 = vunpack.c.h.b16 %v996
      %v1151 = vunpack.c.l.b16 %v997
      %v1152 = vunpack.c.h.b16 %v997
      %v1153 = vunpack.c.l.b16 %v998
      %v1154 = vunpack.c.h.b16 %v998
      %v1155 = vunpack.c.l.b16 %v999
      %v1156 = vunpack.c.h.b16 %v999
      %v1157 = vunpack.c.l.b16 %v1000
      %v1158 = vunpack.c.h.b16 %v1000
      %v1159 = vunpack.c.l.b16 %v1001
      %v1160 = vunpack.c.h.b16 %v1001
      %v1161 = vunpack.c.l.b16 %v1002
      %v1162 = vunpack.c.h.b16 %v1002
      %v1163 = vunpack.c.l.b16 %v1003
      %v1164 = vunpack.c.h.b16 %v1003
      %v1165 = vunpack.c.l.b16 %v1004
      %v1166 = vunpack.c.h.b16 %v1004
      %v1167 = vunpack.c.l.b16 %v1005
      %v1168 = vunpack.c.h.b16 %v1005
      %v1169 = vunpack.c.l.b16 %v1006
      %v1170 = vunpack.c.h.b16 %v1006
      %v1171 = vunpack.c.l.b16 %v1007
      %v1172 = vunpack.c.h.b16 %v1007
      %v1173 = vunpack.c.l.b16 %v1008
      %v1174 = vunpack.c.h.b16 %v1008
      %v1175 = vunpack.c.l.b16 %v1009
      %v1176 = vunpack.c.h.b16 %v1009
      %v1177 = vunpack.c.l.b16 %v1010
      %v1178 = vunpack.c.h.b16 %v1010
      %v1179 = vunpack.c.l.b16 %v1011
      %v1180 = vunpack.c.h.b16 %v1011
      %v1181 = vunpack.c.l.b16 %v1012
      %v1182 = vunpack.c.h.b16 %v1012
      %v1183 = vunpack.c.l.b16 %v1013
      %v1184 = vunpack.c.h.b16 %v1013
      %v1185 = vunpack.c.l.b16 %v1014
      %v1186 = vunpack.c.h.b16 %v1014
      %v1187 = vunpack.c.l.b16 %v1015
      %v1188 = vunpack.c.h.b16 %v1015
      %v1189 = vunpack.c.l.b16 %v1016
      %v1190 = vunpack.c.h.b16 %v1016
      %v1191 = vunpack.c.l.b16 %v1017
      %v1192 = vunpack.c.h.b16 %v1017
      %v1193 = vunpack.c.l.b16 %v1018
      %v1194 = vunpack.c.h.b16 %v1018
      %v1195 = vunpack.c.l.b16 %v1019
      %v1196 = vunpack.c.h.b16 %v1019
      %v1197 = vunpack.c.l.b16 %v1020
      %v1198 = vunpack.c.h.b16 %v1020
      %v1199 = vunpack.c.l.b16 %v1021
      %v1200 = vunpack.c.h.b16 %v1021
      %v1201 = vunpack.c.l.b16 %v1022
      %v1202 = vunpack.c.h.b16 %v1022
      %v1203 = vunpack.c.l.b16 %v1023
      %v1204 = vunpack.c.h.b16 %v1023
      %v1205 = vunpack.c.l.b16 %v1024
      %v1206 = vunpack.c.h.b16 %v1024
      %v1207 = vunpack.c.l.b16 %v1025
      %v1208 = vunpack.c.h.b16 %v1025
      %v1209 = vunpack.c.l.b16 %v1026
      %v1210 = vunpack.c.h.b16 %v1026
      %v1211 = vunpack.c.l.b16 %v1027
      %v1212 = vunpack.c.h.b16 %v1027
      %v1213 = vunpack.c.l.b16 %v1028
      %v1214 = vunpack.c.h.b16 %v1028
      %v1215 = vunpack.c.l.b16 %v1029
      %v1216 = vunpack.c.h.b16 %v1029
      %v1217 = vunpack.c.l.b16 %v1030
      %v1218 = vunpack.c.h.b16 %v1030
      %v1219 = vunpack.c.l.b16 %v1031
      %v1220 = vunpack.c.h.b16 %v1031
      %v1221 = vunpack.c.l.b16 %v1032
      %v1222 = vunpack.c.h.b16 %v1032
      %v1223 = vunpack.c.l.b16 %v1033
      %v1224 = vunpack.c.h.b16 %v1033
      %v1225 = vunpack.c.l.b16 %v1034
      %v1226 = vunpack.c.h.b16 %v1034
      %v1227 = vunpack.c.l.b16 %v1035
      %v1228 = vunpack.c.h.b16 %v1035
      %v1229 = vunpack.c.l.b16 %v1036
      %v1230 = vunpack.c.h.b16 %v1036
      %v1231 = vunpack.c.l.b16 %v1037
      %v1232 = vunpack.c.h.b16 %v1037
      %v1233 = vunpack.c.l.b16 %v1038
      %v1234 = vunpack.c.h.b16 %v1038
      %v1235 = vunpack.c.l.b16 %v1039
      %v1236 = vunpack.c.h.b16 %v1039
      %v1237 = vunpack.c.l.b16 %v1040
      %v1238 = vunpack.c.h.b16 %v1040
      %v1239 = vunpack.c.l.b16 %v1041
      %v1240 = vunpack.c.h.b16 %v1041
      %v1241 = vunpack.c.l.b16 %v1042
      %v1242 = vunpack.c.h.b16 %v1042
      %v1243 = vunpack.c.l.b16 %v1043
      %v1244 = vunpack.c.h.b16 %v1043
      %v1245 = vunpack.c.l.b16 %v1044
      %v1246 = vunpack.c.h.b16 %v1044
      %v1247 = vpack.c.b16 %v1123, %v1119
      %v1248 = vpack.c.b16 %v1124, %v1120
      %v1249 = vpack.c.b16 %v1125, %v1121
      %v1250 = vpack.c.b16 %v1126, %v1122
      %v1251 = vpack.c.b16 %v1131, %v1127
      %v1252 = vpack.c.b16 %v1132, %v1128
      %v1253 = vpack.c.b16 %v1133, %v1129
      %v1254 = vpack.c.b16 %v1134, %v1130
      %v1255 = vpack.c.b16 %v1139, %v1135
      %v1256 = vpack.c.b16 %v1140, %v1136
      %v1257 = vpack.c.b16 %v1141, %v1137
      %v1258 = vpack.c.b16 %v1142, %v1138
      %v1259 = vpack.c.b16 %v1147, %v1143
      %v1260 = vpack.c.b16 %v1148, %v1144
      %v1261 = vpack.c.b16 %v1149, %v1145
      %v1262 = vpack.c.b16 %v1150, %v1146
      %v1263 = vpack.c.b16 %v1155, %v1151
      %v1264 = vpack.c.b16 %v1156, %v1152
      %v1265 = vpack.c.b16 %v1157, %v1153
      %v1266 = vpack.c.b16 %v1158, %v1154
      %v1267 = vpack.c.b16 %v1163, %v1159
      %v1268 = vpack.c.b16 %v1164, %v1160
      %v1269 = vpack.c.b16 %v1165, %v1161
      %v1270 = vpack.c.b16 %v1166, %v1162
      %v1271 = vpack.c.b16 %v1171, %v1167
      %v1272 = vpack.c.b16 %v1172, %v1168
      %v1273 = vpack.c.b16 %v1173, %v1169
      %v1274 = vpack.c.b16 %v1174, %v1170
      %v1275 = vpack.c.b16 %v1179, %v1175
      %v1276 = vpack.c.b16 %v1180, %v1176
      %v1277 = vpack.c.b16 %v1181, %v1177
      %v1278 = vpack.c.b16 %v1182, %v1178
      %v1279 = vpack.c.b16 %v1187, %v1183
      %v1280 = vpack.c.b16 %v1188, %v1184
      %v1281 = vpack.c.b16 %v1189, %v1185
      %v1282 = vpack.c.b16 %v1190, %v1186
      %v1283 = vpack.c.b16 %v1195, %v1191
      %v1284 = vpack.c.b16 %v1196, %v1192
      %v1285 = vpack.c.b16 %v1197, %v1193
      %v1286 = vpack.c.b16 %v1198, %v1194
      %v1287 = vpack.c.b16 %v1203, %v1199
      %v1288 = vpack.c.b16 %v1204, %v1200
      %v1289 = vpack.c.b16 %v1205, %v1201
      %v1290 = vpack.c.b16 %v1206, %v1202
      %v1291 = vpack.c.b16 %v1211, %v1207
      %v1292 = vpack.c.b16 %v1212, %v1208
      %v1293 = vpack.c.b16 %v1213, %v1209
      %v1294 = vpack.c.b16 %v1214, %v1210
      %v1295 = vpack.c.b16 %v1219, %v1215
      %v1296 = vpack.c.b16 %v1220, %v1216
      %v1297 = vpack.c.b16 %v1221, %v1217
      %v1298 = vpack.c.b16 %v1222, %v1218
      %v1299 = vpack.c.b16 %v1227, %v1223
      %v1300 = vpack.c.b16 %v1228, %v1224
      %v1301 = vpack.c.b16 %v1229, %v1225
      %v1302 = vpack.c.b16 %v1230, %v1226
      %v1303 = vpack.c.b16 %v1235, %v1231
      %v1304 = vpack.c.b16 %v1236, %v1232
      %v1305 = vpack.c.b16 %v1237, %v1233
      %v1306 = vpack.c.b16 %v1238, %v1234
      %v1307 = vpack.c.b16 %v1243, %v1239
      %v1308 = vpack.c.b16 %v1244, %v1240
      %v1309 = vpack.c.b16 %v1245, %v1241
      %v1310 = vpack.c.b16 %v1246, %v1242
      %1375 = vmatpush.bf16.msra.mxu0 %v1275
      %1376 = vmatpush.bf16.msra.mxu0 %v1271
      %1377 = vmatpush.bf16.msra.mxu0 %v1267
      %1378 = vmatpush.bf16.msra.mxu0 %v1263
      %1379 = vmatpush.bf16.msra.mxu0 %v1259
      %1380 = vmatpush.bf16.msra.mxu0 %v1255
      %1381 = vmatpush.bf16.msra.mxu0 %v1251
      %1382 = vmatpush.bf16.msra.mxu0 %v1247
      %1383 = vmatmul.bf16.gmra.mxu0 %v979
      %v1384 = vpop.f32.mrf.mxu0
      %v1385 = vadd.f32 %v1047, %v1384
      %v1386 = vpop.f32.mrf.mxu0
      %1387 = vdwg.mxu0
      %1388 = vmatpush.bf16.msra.mxu0 %v1307
      %1389 = vmatpush.bf16.msra.mxu0 %v1303
      %1390 = vmatpush.bf16.msra.mxu0 %v1299
      %1391 = vmatpush.bf16.msra.mxu0 %v1295
      %1392 = vmatpush.bf16.msra.mxu0 %v1291
      %1393 = vmatpush.bf16.msra.mxu0 %v1287
      %1394 = vmatpush.bf16.msra.mxu0 %v1283
      %1395 = vmatpush.bf16.msra.mxu0 %v1279
      %1396 = vmatmul.bf16.gmra.mxu0 %v980
      %v1397 = vpop.f32.mrf.mxu0
      %v1398 = vadd.f32 %v1385, %v1397
      %v1399 = vpop.f32.mrf.mxu0
      %1400 = vdwg.mxu0
      %1401 = vmatpush.bf16.msra.mxu0 %v1276
      %1402 = vmatpush.bf16.msra.mxu0 %v1272
      %1403 = vmatpush.bf16.msra.mxu0 %v1268
      %1404 = vmatpush.bf16.msra.mxu0 %v1264
      %1405 = vmatpush.bf16.msra.mxu0 %v1260
      %1406 = vmatpush.bf16.msra.mxu0 %v1256
      %1407 = vmatpush.bf16.msra.mxu0 %v1252
      %1408 = vmatpush.bf16.msra.mxu0 %v1248
      %1409 = vmatmul.bf16.gmra.mxu0 %v979
      %v1410 = vpop.f32.mrf.mxu0
      %v1411 = vadd.f32 %v1048, %v1410
      %v1412 = vpop.f32.mrf.mxu0
      %1413 = vdwg.mxu0
      %1414 = vmatpush.bf16.msra.mxu0 %v1308
      %1415 = vmatpush.bf16.msra.mxu0 %v1304
      %1416 = vmatpush.bf16.msra.mxu0 %v1300
      %1417 = vmatpush.bf16.msra.mxu0 %v1296
      %1418 = vmatpush.bf16.msra.mxu0 %v1292
      %1419 = vmatpush.bf16.msra.mxu0 %v1288
      %1420 = vmatpush.bf16.msra.mxu0 %v1284
      %1421 = vmatpush.bf16.msra.mxu0 %v1280
      %1422 = vmatmul.bf16.gmra.mxu0 %v980
      %v1423 = vpop.f32.mrf.mxu0
      %v1424 = vadd.f32 %v1411, %v1423
      %v1425 = vpop.f32.mrf.mxu0
      %1426 = vdwg.mxu0
      %1427 = vmatpush.bf16.msra.mxu0 %v1277
      %1428 = vmatpush.bf16.msra.mxu0 %v1273
      %1429 = vmatpush.bf16.msra.mxu0 %v1269
      %1430 = vmatpush.bf16.msra.mxu0 %v1265
      %1431 = vmatpush.bf16.msra.mxu0 %v1261
      %1432 = vmatpush.bf16.msra.mxu0 %v1257
      %1433 = vmatpush.bf16.msra.mxu0 %v1253
      %1434 = vmatpush.bf16.msra.mxu0 %v1249
      %1435 = vmatmul.bf16.gmra.mxu0 %v979
      %v1436 = vpop.f32.mrf.mxu0
      %v1437 = vadd.f32 %v1049, %v1436
      %v1438 = vpop.f32.mrf.mxu0
      %1439 = vdwg.mxu0
      %1440 = vmatpush.bf16.msra.mxu0 %v1309
      %1441 = vmatpush.bf16.msra.mxu0 %v1305
      %1442 = vmatpush.bf16.msra.mxu0 %v1301
      %1443 = vmatpush.bf16.msra.mxu0 %v1297
      %1444 = vmatpush.bf16.msra.mxu0 %v1293
      %1445 = vmatpush.bf16.msra.mxu0 %v1289
      %1446 = vmatpush.bf16.msra.mxu0 %v1285
      %1447 = vmatpush.bf16.msra.mxu0 %v1281
      %1448 = vmatmul.bf16.gmra.mxu0 %v980
      %v1449 = vpop.f32.mrf.mxu0
      %v1450 = vadd.f32 %v1437, %v1449
      %v1451 = vpop.f32.mrf.mxu0
      %1452 = vdwg.mxu0
      %1453 = vmatpush.bf16.msra.mxu0 %v1278
      %1454 = vmatpush.bf16.msra.mxu0 %v1274
      %1455 = vmatpush.bf16.msra.mxu0 %v1270
      %1456 = vmatpush.bf16.msra.mxu0 %v1266
      %1457 = vmatpush.bf16.msra.mxu0 %v1262
      %1458 = vmatpush.bf16.msra.mxu0 %v1258
      %1459 = vmatpush.bf16.msra.mxu0 %v1254
      %1460 = vmatpush.bf16.msra.mxu0 %v1250
      %1461 = vmatmul.bf16.gmra.mxu0 %v979
      %v1462 = vpop.f32.mrf.mxu0
      %v1463 = vadd.f32 %v1050, %v1462
      %v1464 = vpop.f32.mrf.mxu0
      %1465 = vdwg.mxu0
      %1466 = vmatpush.bf16.msra.mxu0 %v1310
      %1467 = vmatpush.bf16.msra.mxu0 %v1306
      %1468 = vmatpush.bf16.msra.mxu0 %v1302
      %1469 = vmatpush.bf16.msra.mxu0 %v1298
      %1470 = vmatpush.bf16.msra.mxu0 %v1294
      %1471 = vmatpush.bf16.msra.mxu0 %v1290
      %1472 = vmatpush.bf16.msra.mxu0 %v1286
      %1473 = vmatpush.bf16.msra.mxu0 %v1282
      %1474 = vmatmul.bf16.gmra.mxu0 %v980
      %v1475 = vpop.f32.mrf.mxu0
      %v1476 = vadd.f32 %v1463, %v1475
      %v1477 = vpop.f32.mrf.mxu0
      %1478 = vdwg.mxu0
      %v1479 = vxor.u32 %v1398, 2147483648
      %v1480 = vmul.f32 %v1479, 1.442695
      %v1481 = vpow.pop %v1480
      %v1482 = vadd.f32 %v1481, 1.0
      %v1483 = vrcp.pop %v1482
      %v1484 = vmul.f32 %v1482, %v1483
      %v1485 = vsub.f32 1.0, %v1484
      %v1486 = vmul.f32 %v1483, %v1485
      %v1487 = vadd.f32 %v1483, %v1486
      %vm1488 = vweird.f32 %v1482
      %vm1489 = vweird.f32 %v1483
      %vm1490 = vmor %vm1488, %vm1489
      %v1491 = vsel %vm1490, %v1483, %v1487
      %v1492 = vand.u32 2147483647, %v1482
      %vm1493 = vcmp.eq.f32.partialorder %v1492, 8.507059e+37
      %v1494 = vand.u32 %v1482, 2147483648
      %v1495 = vor.u32 1.1754944e-38, %v1494
      %v1496 = vsel %vm1493, %v1495, %v1491
      %v1497 = vmul.f32 1.0, %v1496
      %v1498 = vxor.u32 %v1424, 2147483648
      %v1499 = vmul.f32 %v1498, 1.442695
      %v1500 = vpow.pop %v1499
      %v1501 = vadd.f32 %v1500, 1.0
      %v1502 = vrcp.pop %v1501
      %v1503 = vmul.f32 %v1501, %v1502
      %v1504 = vsub.f32 1.0, %v1503
      %v1505 = vmul.f32 %v1502, %v1504
      %v1506 = vadd.f32 %v1502, %v1505
      %vm1507 = vweird.f32 %v1501
      %vm1508 = vweird.f32 %v1502
      %vm1509 = vmor %vm1507, %vm1508
      %v1510 = vsel %vm1509, %v1502, %v1506
      %v1511 = vand.u32 2147483647, %v1501
      %vm1512 = vcmp.eq.f32.partialorder %v1511, 8.507059e+37
      %v1513 = vand.u32 %v1501, 2147483648
      %v1514 = vor.u32 1.1754944e-38, %v1513
      %v1515 = vsel %vm1512, %v1514, %v1510
      %v1516 = vmul.f32 1.0, %v1515
      %v1517 = vtanh.pop %v1450
      %v1518 = vxor.u32 %v1476, 2147483648
      %v1519 = vmul.f32 %v1518, 1.442695
      %v1520 = vpow.pop %v1519
      %v1521 = vadd.f32 %v1520, 1.0
      %v1522 = vrcp.pop %v1521
      %v1523 = vmul.f32 %v1521, %v1522
      %v1524 = vsub.f32 1.0, %v1523
      %v1525 = vmul.f32 %v1522, %v1524
      %v1526 = vadd.f32 %v1522, %v1525
      %vm1527 = vweird.f32 %v1521
      %vm1528 = vweird.f32 %v1522
      %vm1529 = vmor %vm1527, %vm1528
      %v1530 = vsel %vm1529, %v1522, %v1526
      %v1531 = vand.u32 2147483647, %v1521
      %vm1532 = vcmp.eq.f32.partialorder %v1531, 8.507059e+37
      %v1533 = vand.u32 %v1521, 2147483648
      %v1534 = vor.u32 1.1754944e-38, %v1533
      %v1535 = vsel %vm1532, %v1534, %v1530
      %v1536 = vmul.f32 1.0, %v1535
      %v1537 = vmul.f32 %v1516, %v170
      %v1538 = vmul.f32 %v1497, %v1517
      %v1539 = vadd.f32 %v1537, %v1538
      %v1540 = vtanh.pop %v1539
      %v1541 = vmul.f32 %v1536, %v1540
      %1542 = vst [vmem:[#allocation17] sm:$0xff] %v978
      %1543 = vst [vmem:[#allocation19] sm:$0xff] %v976
      %1544 = vst [vmem:[#allocation20] sm:$0xff] %v1541
      %1545 = vst [vmem:[#allocation22] sm:$0xff] %v1539
      %v1546 = vpack.c.bf16 %v1541, %v1541
      %1547 = vst [vmem:[#allocation2] sm:$0xf] %v1546
    $region85: #{tpu_custom_call.1} parent=1 // pred_fallthru
      _
    %v1548 = vld [vmem:[#allocation2] sm:$0xf]
    %v1549 = vld [vmem:[#allocation15] sm:$0xf]
    %v1550 = vld [vmem:[#allocation15 + $0x4] sm:$0xf]
    %v1551 = vld [vmem:[#allocation15 + $0x8] sm:$0xf]
    %v1552 = vld [vmem:[#allocation15 + $0xc] sm:$0xf]
    %v1553 = vld [vmem:[#allocation15 + $0x10] sm:$0xf]
    %v1554 = vld [vmem:[#allocation15 + $0x14] sm:$0xf]
    %v1555 = vld [vmem:[#allocation15 + $0x18] sm:$0xf]
    %v1556 = vld [vmem:[#allocation15 + $0x1c] sm:$0xf]
    %v1557 = vld [vmem:[#allocation15 + $0x20] sm:$0xf]
    %v1558 = vld [vmem:[#allocation15 + $0x24] sm:$0xf]
    %v1559 = vld [vmem:[#allocation15 + $0x28] sm:$0xf]
    %v1560 = vld [vmem:[#allocation15 + $0x2c] sm:$0xf]
    %v1561 = vld [vmem:[#allocation15 + $0x30] sm:$0xf]
    %v1562 = vld [vmem:[#allocation15 + $0x34] sm:$0xf]
    %v1563 = vld [vmem:[#allocation15 + $0x38] sm:$0xf]
    %v1564 = vld [vmem:[#allocation15 + $0x3c] sm:$0xf]
    %v1565 = vld [vmem:[%s12] sm:$0x1]
    %v1567 = vperm.slane %v1565, 0
    %v1585 = vunpack.c.l.b16 %v1549
    %v1586 = vunpack.c.l.b16 %v1550
    %v1587 = vunpack.c.l.b16 %v1551
    %v1588 = vunpack.c.l.b16 %v1552
    %v1589 = vunpack.c.l.b16 %v1553
    %v1590 = vunpack.c.l.b16 %v1554
    %v1591 = vunpack.c.l.b16 %v1555
    %v1592 = vunpack.c.l.b16 %v1556
    %v1593 = vunpack.c.l.b16 %v1557
    %v1594 = vunpack.c.l.b16 %v1558
    %v1595 = vunpack.c.l.b16 %v1559
    %v1596 = vunpack.c.l.b16 %v1560
    %v1597 = vunpack.c.l.b16 %v1561
    %v1598 = vunpack.c.l.b16 %v1562
    %v1599 = vunpack.c.l.b16 %v1563
    %v1600 = vunpack.c.l.b16 %v1564
    %v1601 = vpack.c.b16 %v1586, %v1585
    %v1602 = vpack.c.b16 %v1588, %v1587
    %v1603 = vpack.c.b16 %v1590, %v1589
    %v1604 = vpack.c.b16 %v1592, %v1591
    %v1605 = vpack.c.b16 %v1594, %v1593
    %v1606 = vpack.c.b16 %v1596, %v1595
    %v1607 = vpack.c.b16 %v1598, %v1597
    %v1608 = vpack.c.b16 %v1600, %v1599
    %1617 = vmatpush.bf16.msra.mxu0 %v1608
    %1618 = vmatpush.bf16.msra.mxu0 %v1607
    %1619 = vmatpush.bf16.msra.mxu0 %v1606
    %1620 = vmatpush.bf16.msra.mxu0 %v1605
    %1621 = vmatpush.bf16.msra.mxu0 %v1604
    %1622 = vmatpush.bf16.msra.mxu0 %v1603
    %1623 = vmatpush.bf16.msra.mxu0 %v1602
    %1624 = vmatpush.bf16.msra.mxu0 %v1601
    %1625 = vmatmul.bf16.gmra.mxu0 %v1548
    %v1626 = vpop.f32.mrf.mxu0
    %v1627 = vadd.f32 %v1567, %v1626
    %v1628 = vpop.f32.mrf.mxu0
    %1629 = vdwg.mxu0
    %1630 = vst [vmem:[#allocation16] sm:$0xff] %v1627
    // Predicated region
    $region86: #{tpu_custom_call.1} parent=1 // pred_check
      _
    $region87: #{tpu_custom_call.1} parent=1 // pred_check_branch
      %1632 = sbr.rel (0) target = $region89
    $region88: #{tpu_custom_call.1} parent=1 // pred_region
      %1634 = vsyncadd [#allocation6], 0
      %s1636 = sshll.u32 [#allocation16], 4
      %s1637 = int_to_ptr.vmem [resolvable:$true] %s1636
      %s1638 = sshll.u32 %s13, 4
      %s1639 = int_to_ptr.hbm [resolvable:$true] %s1638
      %1641 = dma.vmem_to_hbm [thread:$0]  %s1637, 128, %s1639, [#allocation6]
    $region89: #{tpu_custom_call.1} parent=1 // pred_fallthru
      _
    // Predicated region
    $region90: #{tpu_custom_call.1} parent=1 // pred_check
      _
    $region91: #{tpu_custom_call.1} parent=1 // pred_check_branch
      %1643 = sbr.rel (0) target = $region93
    $region92: #{tpu_custom_call.1} parent=1 // pred_region
      %1645 = vsyncadd [#allocation18], 0
      %s1647 = sshll.u32 [#allocation17], 4
      %s1648 = int_to_ptr.vmem [resolvable:$true] %s1647
      %s1649 = sshll.u32 %s14, 4
      %s1650 = int_to_ptr.hbm [resolvable:$true] %s1649
      %1652 = dma.vmem_to_hbm [thread:$0]  %s1648, 128, %s1650, [#allocation18]
    $region93: #{tpu_custom_call.1} parent=1 // pred_fallthru
      _
    // Predicated region
    $region94: #{tpu_custom_call.1} parent=1 // pred_check
      _
    $region95: #{tpu_custom_call.1} parent=1 // pred_check_branch
      %1654 = sbr.rel (0) target = $region97
    $region96: #{tpu_custom_call.1} parent=1 // pred_region
      %1656 = vsyncadd [#allocation18], 0
      %s1658 = sshll.u32 [#allocation19], 4
      %s1659 = int_to_ptr.vmem [resolvable:$true] %s1658
      %s1660 = sshll.u32 %s15, 4
      %s1661 = int_to_ptr.hbm [resolvable:$true] %s1660
      %1663 = dma.vmem_to_hbm [thread:$0]  %s1659, 128, %s1661, [#allocation18]
    $region97: #{tpu_custom_call.1} parent=1 // pred_fallthru
      _
    // Predicated region
    $region98: #{tpu_custom_call.1} parent=1 // pred_check
      _
    $region99: #{tpu_custom_call.1} parent=1 // pred_check_branch
      %1665 = sbr.rel (0) target = $region101
    $region100: #{tpu_custom_call.1} parent=1 // pred_region
      %1667 = vsyncadd [#allocation21], 0
      %s1669 = sshll.u32 [#allocation20], 4
      %s1670 = int_to_ptr.vmem [resolvable:$true] %s1669
      %s1671 = sshll.u32 %s16, 4
      %s1672 = int_to_ptr.hbm [resolvable:$true] %s1671
      %1674 = dma.vmem_to_hbm [thread:$0]  %s1670, 128, %s1672, [#allocation21]
    $region101: #{tpu_custom_call.1} parent=1 // pred_fallthru
      _
    // Predicated region
    $region102: #{tpu_custom_call.1} parent=1 // pred_check
      _
    $region103: #{tpu_custom_call.1} parent=1 // pred_check_branch
      %1676 = sbr.rel (0) target = $region105
    $region104: #{tpu_custom_call.1} parent=1 // pred_region
      %1678 = vsyncadd [#allocation21], 0
      %s1680 = sshll.u32 [#allocation22], 4
      %s1681 = int_to_ptr.vmem [resolvable:$true] %s1680
      %s1682 = sshll.u32 %s17, 4
      %s1683 = int_to_ptr.hbm [resolvable:$true] %s1682
      %1685 = dma.vmem_to_hbm [thread:$0]  %s1681, 128, %s1683, [#allocation21]
    $region105: #{tpu_custom_call.1} parent=1 // pred_fallthru
      _
    // Predicated region
    $region106: #{tpu_custom_call.1} parent=1 // pred_check
      _
    $region107: #{tpu_custom_call.1} parent=1 // pred_check_branch
      %1687 = sbr.rel (0) target = $region109
    $region108: #{tpu_custom_call.1} parent=1 // pred_region
      %1689 = dma.done [#allocation6], 128
    $region109: #{tpu_custom_call.1} parent=1 // pred_fallthru
      _
    // Predicated region
    $region110: #{tpu_custom_call.1} parent=1 // pred_check
      _
    $region111: #{tpu_custom_call.1} parent=1 // pred_check_branch
      %1691 = sbr.rel (0) target = $region113
    $region112: #{tpu_custom_call.1} parent=1 // pred_region
      %1693 = dma.done [#allocation18], 128
    $region113: #{tpu_custom_call.1} parent=1 // pred_fallthru
      _
    // Predicated region
    $region114: #{tpu_custom_call.1} parent=1 // pred_check
      _
    $region115: #{tpu_custom_call.1} parent=1 // pred_check_branch
      %1695 = sbr.rel (0) target = $region117
    $region116: #{tpu_custom_call.1} parent=1 // pred_region
      %1697 = dma.done [#allocation18], 128
    $region117: #{tpu_custom_call.1} parent=1 // pred_fallthru
      _
    // Predicated region
    $region118: #{tpu_custom_call.1} parent=1 // pred_check
      _
    $region119: #{tpu_custom_call.1} parent=1 // pred_check_branch
      %1699 = sbr.rel (0) target = $region121
    $region120: #{tpu_custom_call.1} parent=1 // pred_region
      %1701 = dma.done [#allocation21], 128
    $region121: #{tpu_custom_call.1} parent=1 // pred_fallthru
      _
    // Predicated region
    $region122: #{tpu_custom_call.1} parent=1 // pred_check
      _
    $region123: #{tpu_custom_call.1} parent=1 // pred_check_branch
      %1703 = sbr.rel (0) target = $region125
    $region124: #{tpu_custom_call.1} parent=1 // pred_region
      %1705 = dma.done [#allocation21], 128
    $region125: #{tpu_custom_call.1} parent=1 // pred_fallthru
      _
    %1706 = vsyncpa [#allocation5], 1
    %1707 = vsyncpa [#allocation8], 1
    %1708 = vsyncpa [#allocation11], 1
    %1709 = vsyncpa [#allocation14], 1
    %1710 = vsyncpa [#allocation6], 1
    %1711 = vsyncpa [#allocation18], 1
    %1712 = vsyncpa [#allocation21], 1

</llo_original>
